<compile_context>
chip_gen: v6e
topology: v6e:2x2x1
jax: 0.10.0
libtpu: 0.0.40
codegen_flags: <defaults>
</compile_context>

<pallas_src>
import math

import jax
import jax.numpy as jnp
from jax.experimental import pallas as pl
from jax.experimental.pallas import tpu as pltpu

# ----------------------- synthetic model config -----------------------------
B = 2            # batch
S = 16           # sequence length
H = 32           # hidden size
NUM_HEADS = 2
HD = H // NUM_HEADS
FFN = 64         # intermediate size
VOCAB = 64
TYPE_VOCAB = 2
N_LAYERS = 2
LN_EPS = 1e-12
NEG_INF = -1e9
LANE = 128       # lane-dense output width


# ----------------------- shared math (kernel AND reference) ------------------
def _layer_norm(x, g, b):
    mu = jnp.mean(x, axis=-1, keepdims=True)
    var = jnp.mean(jnp.square(x - mu), axis=-1, keepdims=True)
    return (x - mu) * jax.lax.rsqrt(var + LN_EPS) * g + b


def _encoder_layer_math(x, mask_add, wqkv, bqkv, wo, bo, ln1g, ln1b,
                        w1, b1, w2, b2, ln2g, ln2b, *, approx_recip):
    """One BERT encoder layer on a (S, H) f32 slab for a single sequence.

    wqkv: (H, 3H) bf16, bqkv: (1, 3H) f32, wo: (H, H) bf16, bo: (1, H) f32,
    w1: (H, FFN) bf16, w2: (FFN, H) bf16, LN params f32.
    mask_add: (1, S) additive key mask.
    """
    scale = 1.0 / math.sqrt(HD)

    xb = x.astype(jnp.bfloat16)                                   # hoisted cast
    qkv = jnp.dot(xb, wqkv, preferred_element_type=jnp.float32) + bqkv   # (S, 3H)
    qkvb = qkv.astype(jnp.bfloat16)                               # hoisted cast

    ctx_heads = []
    # TODO(synk): fold this static head loop into a heads-as-batch dot_general at real head counts.
    for h in range(NUM_HEADS):
        qh = qkvb[:, h * HD:(h + 1) * HD]                         # (S, HD) static lane slice
        kh = qkvb[:, H + h * HD:H + (h + 1) * HD]
        vh = qkvb[:, 2 * H + h * HD:2 * H + (h + 1) * HD]
        scores = jax.lax.dot_general(
            qh, kh, (((1,), (1,)), ((), ())),
            preferred_element_type=jnp.float32) * scale + mask_add        # (S, S)
        m = jnp.max(scores, axis=-1, keepdims=True)
        e = jnp.exp(scores - m)
        denom = jnp.sum(e, axis=-1, keepdims=True)
        if approx_recip:
            probs = e * pl.reciprocal(denom, approx=True)          # EUP slot
        else:
            probs = e / denom
        ctx_heads.append(jnp.dot(probs.astype(jnp.bfloat16), vh,
                                 preferred_element_type=jnp.float32))      # (S, HD)

    ctx = jnp.concatenate(ctx_heads, axis=-1)                      # (S, H) f32
    attn = jnp.dot(ctx.astype(jnp.bfloat16), wo,
                   preferred_element_type=jnp.float32) + bo        # single output projection

    h1 = _layer_norm(x + attn, ln1g, ln1b)
    h1b = h1.astype(jnp.bfloat16)                                  # hoisted cast
    ff = jax.nn.gelu(jnp.dot(h1b, w1, preferred_element_type=jnp.float32) + b1,
                     approximate=True)
    ff2 = jnp.dot(ff.astype(jnp.bfloat16), w2,
                  preferred_element_type=jnp.float32) + b2
    return _layer_norm(h1 + ff2, ln2g, ln2b)


# ----------------------- fused Pallas kernel ---------------------------------
def _fused_forward_kernel(sp_ref, ep_ref,                         # scalar prefetch (SMEM)
                          emb_ref, mask_ref, embg_ref, embb_ref,
                          wqkv_ref, bqkv_ref, wo_ref, bo_ref,
                          ln1g_ref, ln1b_ref, w1_ref, b1_ref,
                          w2_ref, b2_ref, ln2g_ref, ln2b_ref,
                          qaw_ref, qab_ref,
                          logits_ref, loss_ref,
                          x_scr):
    b = pl.program_id(0)          # batch (parallel axis)
    li = pl.program_id(1)         # layer (arbitrary / carry axis)

    # Layer 0: embedding LayerNorm, initialize the carried activation slab.
    @pl.when(li == 0)
    def _():
        x_scr[...] = _layer_norm(emb_ref[0], embg_ref[...], embb_ref[...])

    x = x_scr[...]
    x_new = _encoder_layer_math(
        x, mask_ref[0],
        wqkv_ref[0], bqkv_ref[0], wo_ref[0], bo_ref[0],
        ln1g_ref[0], ln1b_ref[0], w1_ref[0], b1_ref[0],
        w2_ref[0], b2_ref[0], ln2g_ref[0], ln2b_ref[0],
        approx_recip=True)
    x_scr[...] = x_new

    # Last layer: QA span head + per-batch CE partials.
    @pl.when(li == pl.num_programs(1) - 1)
    def _():
        # (2, S) logits: row 0 = start, row 1 = end.
        logits_t = jax.lax.dot_general(
            qaw_ref[...], x_new.astype(jnp.bfloat16),
            (((1,), (1,)), ((), ())),
            preferred_element_type=jnp.float32) + qab_ref[...]
        # Lane-dense padded store (last dim = 128, unmasked vst).
        pad = jnp.zeros((2, LANE - S), jnp.float32)
        logits_ref[0] = jnp.concatenate([logits_t, pad], axis=-1)

        # CrossEntropy partials for this batch (ignore_index = S, torch semantics).
        lane = jax.lax.broadcasted_iota(jnp.int32, (1, S), 1)

        def _nll(zrow, pos):
            pos = jnp.clip(pos, 0, S)                      # clamp_(0, ignored_index)
            m = jnp.max(zrow)
            lse = jnp.log(jnp.sum(jnp.exp(zrow - m))) + m
            picked = jnp.sum(jnp.where(lane == pos, zrow, 0.0))
            valid = (pos != S).astype(jnp.float32)         # ignore_index == S
            return (lse - picked) * valid, valid

        nll_s, val_s = _nll(logits_t[0:1, :], sp_ref[b])
        nll_e, val_e = _nll(logits_t[1:2, :], ep_ref[b])

        lane_w = jax.lax.broadcasted_iota(jnp.int32, (1, LANE), 1)
        loss_ref[0] = (jnp.where(lane_w == 0, nll_s, 0.0)
                       + jnp.where(lane_w == 1, val_s, 0.0)
                       + jnp.where(lane_w == 2, nll_e, 0.0)
                       + jnp.where(lane_w == 3, val_e, 0.0))


# ----------------------- BlockSpec helpers -----------------------------------
def _full_spec(arr):
    n = arr.ndim

    def idx(b, li, *_):
        return (0,) * n
    return pl.BlockSpec(tuple(arr.shape), idx)


def _batch_spec(arr):
    n = arr.ndim

    def idx(b, li, *_):
        return (b,) + (0,) * (n - 1)
    return pl.BlockSpec((1,) + tuple(arr.shape[1:]), idx)


def _layer_spec(arr):
    n = arr.ndim

    def idx(b, li, *_):
        return (li,) + (0,) * (n - 1)
    return pl.BlockSpec((1,) + tuple(arr.shape[1:]), idx)


# ----------------------- Pallas wrapper --------------------------------------
def pallas_forward(params, input_ids, token_type_ids, attention_mask,
                   start_positions=None, end_positions=None):
    Bn, Sn = input_ids.shape

    # Embedding gather (plain-JAX glue; no efficient Pallas gather needed here).
    emb = (params['word_emb'][input_ids]
           + params['pos_emb'][None, :, :]
           + params['type_emb'][token_type_ids]).astype(jnp.float32)       # (B, S, H)

    # Per-batch additive key mask (1, S) -- no dense (B*S, B*S) mask.
    mask_add = ((1.0 - attention_mask.astype(jnp.float32)) * NEG_INF
                ).reshape(Bn, 1, Sn)

    have_loss = start_positions is not None and end_positions is not None
    zeros = jnp.zeros((Bn,), jnp.int32)
    sp = (start_positions if have_loss else zeros).reshape(Bn).astype(jnp.int32)
    ep = (end_positions if have_loss else zeros).reshape(Bn).astype(jnp.int32)

    tensor_inputs = [
        emb, mask_add, params['emb_ln_g'], params['emb_ln_b'],
        params['w_qkv'], params['b_qkv'], params['wo'], params['bo'],
        params['ln1g'], params['ln1b'], params['w1'], params['b1'],
        params['w2'], params['b2'], params['ln2g'], params['ln2b'],
        params['qa_w'], params['qa_b'],
    ]

    in_specs = ([_batch_spec(emb), _batch_spec(mask_add),
                 _full_spec(params['emb_ln_g']), _full_spec(params['emb_ln_b'])]
                + [_layer_spec(params[k]) for k in
                   ('w_qkv', 'b_qkv', 'wo', 'bo', 'ln1g', 'ln1b',
                    'w1', 'b1', 'w2', 'b2', 'ln2g', 'ln2b')]
                + [_full_spec(params['qa_w']), _full_spec(params['qa_b'])])

    grid_spec = pltpu.PrefetchScalarGridSpec(
        num_scalar_prefetch=2,                 # start/end positions live in SMEM
        grid=(Bn, N_LAYERS),                   # batch parallel, layers pipelined
        in_specs=in_specs,
        out_specs=(pl.BlockSpec((1, 2, LANE), lambda b, li, *_: (b, 0, 0)),
                   pl.BlockSpec((1, 1, LANE), lambda b, li, *_: (b, 0, 0))),
        scratch_shapes=[pltpu.VMEM((Sn, H), jnp.float32)])       # carried activations

    logits_pad, loss_parts = pl.pallas_call(
        _fused_forward_kernel,
        out_shape=(jax.ShapeDtypeStruct((Bn, 2, LANE), jnp.float32),
                   jax.ShapeDtypeStruct((Bn, 1, LANE), jnp.float32)),
        grid_spec=grid_spec,
        compiler_params=pltpu.CompilerParams(
            dimension_semantics=("parallel", "arbitrary")),
    )(sp, ep, *tensor_inputs)

    start_logits = logits_pad[:, 0, :Sn]
    end_logits = logits_pad[:, 1, :Sn]

    total_loss = None
    if have_loss:
        nll_s, val_s = loss_parts[:, 0, 0], loss_parts[:, 0, 1]
        nll_e, val_e = loss_parts[:, 0, 2], loss_parts[:, 0, 3]
        # NOTE: all-ignored batch -> 0/0 NaN, matching torch CrossEntropyLoss.
        total_loss = 0.5 * (jnp.sum(nll_s) / jnp.sum(val_s)
                            + jnp.sum(nll_e) / jnp.sum(val_e))
    return total_loss, start_logits, end_logits


# ----------------------- parameters ------------------------------------------
def init_params(key):
    ks = jax.random.split(key, 8)

    def nrm(k, shape, dtype=jnp.bfloat16):
        return (0.02 * jax.random.normal(k, shape)).astype(dtype)

    L = N_LAYERS
    return dict(
        word_emb=nrm(ks[0], (VOCAB, H), jnp.float32),
        pos_emb=nrm(ks[1], (S, H), jnp.float32),
        type_emb=nrm(ks[2], (TYPE_VOCAB, H), jnp.float32),
        emb_ln_g=jnp.ones((1, H), jnp.float32),
        emb_ln_b=jnp.zeros((1, H), jnp.float32),
        # matmul weights stored bf16 in HBM (halves weight DMA); biases / LN stay f32
        w_qkv=nrm(ks[3], (L, H, 3 * H)),
        b_qkv=jnp.zeros((L, 1, 3 * H), jnp.float32),
        wo=nrm(ks[4], (L, H, H)),
        bo=jnp.zeros((L, 1, H), jnp.float32),
        ln1g=jnp.ones((L, 1, H), jnp.float32), ln1b=jnp.zeros((L, 1, H), jnp.float32),
        w1=nrm(ks[5], (L, H, FFN)), b1=jnp.zeros((L, 1, FFN), jnp.float32),
        w2=nrm(ks[6], (L, FFN, H)), b2=jnp.zeros((L, 1, H), jnp.float32),
        ln2g=jnp.ones((L, 1, H), jnp.float32), ln2b=jnp.zeros((L, 1, H), jnp.float32),
        qa_w=nrm(ks[7], (2, H)),               # nn.Linear(hidden_size, 2).weight (pre-transposed)
        qa_b=jnp.zeros((2, 1), jnp.float32),
    )


# ----------------------- pure-JAX reference ----------------------------------
def ref_forward(params, input_ids, token_type_ids, attention_mask, sp, ep):
    emb = (params['word_emb'][input_ids]
           + params['pos_emb'][None, :, :]
           + params['type_emb'][token_type_ids]).astype(jnp.float32)       # (B, S, H)
    mask_add = (1.0 - attention_mask.astype(jnp.float32)) * NEG_INF        # (B, S)

    start_rows, end_rows = [], []
    for bi in range(B):
        x = _layer_norm(emb[bi], params['emb_ln_g'], params['emb_ln_b'])
        for li in range(N_LAYERS):
            x = _encoder_layer_math(
                x, mask_add[bi:bi + 1, :],
                params['w_qkv'][li], params['b_qkv'][li],
                params['wo'][li], params['bo'][li],
                params['ln1g'][li], params['ln1b'][li],
                params['w1'][li], params['b1'][li],
                params['w2'][li], params['b2'][li],
                params['ln2g'][li], params['ln2b'][li],
                approx_recip=False)
        lg = jax.lax.dot_general(params['qa_w'], x.astype(jnp.bfloat16),
                                 (((1,), (1,)), ((), ())),
                                 preferred_element_type=jnp.float32) + params['qa_b']
        start_rows.append(lg[0])
        end_rows.append(lg[1])

    start_logits = jnp.stack(start_rows)                                    # (B, S)
    end_logits = jnp.stack(end_rows)

    def ce(lg, pos):
        pos = jnp.clip(pos, 0, S)
        m = jnp.max(lg, axis=-1, keepdims=True)
        z = lg - m
        logp = z - jnp.log(jnp.sum(jnp.exp(z), axis=-1, keepdims=True))
        onehot = jnp.arange(S)[None, :] == pos[:, None]
        nll = -jnp.sum(jnp.where(onehot, logp, 0.0), axis=-1)
        valid = (pos != S).astype(jnp.float32)
        return jnp.sum(nll * valid) / jnp.sum(valid)

    loss = 0.5 * (ce(start_logits, sp) + ce(end_logits, ep))
    return start_logits, end_logits, loss


# ----------------------- demo -------------------------------------------------
if __name__ == "__main__":
    key = jax.random.PRNGKey(0)
    pkey, ikey = jax.random.split(key)
    params = init_params(pkey)

    input_ids = jax.random.randint(ikey, (B, S), 0, VOCAB, dtype=jnp.int32)
    token_type_ids = jnp.zeros((B, S), jnp.int32)
    attention_mask = jnp.ones((B, S), jnp.int32).at[1, S - 3:].set(0)
    start_positions = jnp.array([1, 4], jnp.int32)
    end_positions = jnp.array([3, 20], jnp.int32)   # 20 > S -> clamped to S -> ignored

    loss, start_logits, end_logits = pallas_forward(
        params, input_ids, token_type_ids, attention_mask,
        start_positions, end_positions)
    jax.block_until_ready((loss, start_logits, end_logits))

    ref_s, ref_e, ref_loss = ref_forward(
        params, input_ids, token_type_ids, attention_mask,
        start_positions, end_positions)

    assert jnp.allclose(start_logits, ref_s, atol=5e-3, rtol=5e-3)
    assert jnp.allclose(end_logits, ref_e, atol=5e-3, rtol=5e-3)
    assert jnp.allclose(loss, ref_loss, atol=5e-3, rtol=5e-3)

    print("KERNEL_OK")
</pallas_src>

<mosaic_0001>
module attributes {stable_mosaic.version = 11 : i64} {
  func.func @_fused_forward_kernel(%arg0: i32, %arg1: i32, %arg2: memref<2xi32, #tpu.memory_space<smem>>, %arg3: memref<2xi32, #tpu.memory_space<smem>>, %arg4: memref<1x16x32xf32, #tpu.memory_space<vmem>>, %arg5: memref<1x1x16xf32, #tpu.memory_space<vmem>>, %arg6: memref<1x32xf32, #tpu.memory_space<vmem>>, %arg7: memref<1x32xf32, #tpu.memory_space<vmem>>, %arg8: memref<1x32x96xbf16, #tpu.memory_space<vmem>>, %arg9: memref<1x1x96xf32, #tpu.memory_space<vmem>>, %arg10: memref<1x32x32xbf16, #tpu.memory_space<vmem>>, %arg11: memref<1x1x32xf32, #tpu.memory_space<vmem>>, %arg12: memref<1x1x32xf32, #tpu.memory_space<vmem>>, %arg13: memref<1x1x32xf32, #tpu.memory_space<vmem>>, %arg14: memref<1x32x64xbf16, #tpu.memory_space<vmem>>, %arg15: memref<1x1x64xf32, #tpu.memory_space<vmem>>, %arg16: memref<1x64x32xbf16, #tpu.memory_space<vmem>>, %arg17: memref<1x1x32xf32, #tpu.memory_space<vmem>>, %arg18: memref<1x1x32xf32, #tpu.memory_space<vmem>>, %arg19: memref<1x1x32xf32, #tpu.memory_space<vmem>>, %arg20: memref<2x32xbf16, #tpu.memory_space<vmem>>, %arg21: memref<2x1xf32, #tpu.memory_space<vmem>>, %arg22: memref<1x2x128xf32, #tpu.memory_space<vmem>>, %arg23: memref<1x1x128xf32, #tpu.memory_space<vmem>>, %arg24: memref<16x32xf32, #tpu.memory_space<vmem>>) attributes {dimension_semantics = [#tpu.dimension_semantics<parallel>, #tpu.dimension_semantics<arbitrary>], iteration_bounds = array<i64: 2, 2>, scalar_prefetch = 2 : i64, scratch_operands = 1 : i64, tpu.core_type = #tpu.core_type<tc>, window_params = [{transform_indices = @transform_0, window_bounds = array<i64: 1, 16, 32>}, {transform_indices = @transform_1, window_bounds = array<i64: 1, 1, 16>}, {pipeline_mode = #tpu.pipeline_mode<synchronous>, transform_indices = @transform_2, window_bounds = array<i64: 1, 32>}, {pipeline_mode = #tpu.pipeline_mode<synchronous>, transform_indices = @transform_3, window_bounds = array<i64: 1, 32>}, {transform_indices = @transform_4, window_bounds = array<i64: 1, 32, 96>}, {transform_indices = @transform_5, window_bounds = array<i64: 1, 1, 96>}, {transform_indices = @transform_6, window_bounds = array<i64: 1, 32, 32>}, {transform_indices = @transform_7, window_bounds = array<i64: 1, 1, 32>}, {transform_indices = @transform_8, window_bounds = array<i64: 1, 1, 32>}, {transform_indices = @transform_9, window_bounds = array<i64: 1, 1, 32>}, {transform_indices = @transform_10, window_bounds = array<i64: 1, 32, 64>}, {transform_indices = @transform_11, window_bounds = array<i64: 1, 1, 64>}, {transform_indices = @transform_12, window_bounds = array<i64: 1, 64, 32>}, {transform_indices = @transform_13, window_bounds = array<i64: 1, 1, 32>}, {transform_indices = @transform_14, window_bounds = array<i64: 1, 1, 32>}, {transform_indices = @transform_15, window_bounds = array<i64: 1, 1, 32>}, {pipeline_mode = #tpu.pipeline_mode<synchronous>, transform_indices = @transform_16, window_bounds = array<i64: 2, 32>}, {pipeline_mode = #tpu.pipeline_mode<synchronous>, transform_indices = @transform_17, window_bounds = array<i64: 2, 1>}, {transform_indices = @transform_18, window_bounds = array<i64: 1, 2, 128>}, {transform_indices = @transform_19, window_bounds = array<i64: 1, 1, 128>}]} {
    %c0_i32 = arith.constant 0 : i32
    %0 = arith.cmpi eq, %arg1, %c0_i32 : i32
    %1 = arith.extui %0 : i1 to i32
    %c0_i32_0 = arith.constant 0 : i32
    %2 = arith.cmpi ne, %1, %c0_i32_0 : i32
    scf.if %2 {
      %c0_71 = arith.constant 0 : index
      %c0_72 = arith.constant 0 : index
      %c0_73 = arith.constant 0 : index
      %151 = vector.load %arg4[%c0_71, %c0_72, %c0_73] : memref<1x16x32xf32, #tpu.memory_space<vmem>>, vector<1x16x32xf32>
      %152 = vector.shape_cast %151 : vector<1x16x32xf32> to vector<16x32xf32>
      %c0_74 = arith.constant 0 : index
      %c0_75 = arith.constant 0 : index
      %153 = vector.load %arg6[%c0_74, %c0_75] : memref<1x32xf32, #tpu.memory_space<vmem>>, vector<1x32xf32>
      %c0_76 = arith.constant 0 : index
      %c0_77 = arith.constant 0 : index
      %154 = vector.load %arg7[%c0_76, %c0_77] : memref<1x32xf32, #tpu.memory_space<vmem>>, vector<1x32xf32>
      %cst_78 = arith.constant dense<0.000000e+00> : vector<16xf32>
      %155 = vector.multi_reduction <add>, %152, %cst_78 [1] : vector<16x32xf32> to vector<16xf32>
      %156 = vector.shape_cast %155 : vector<16xf32> to vector<16x1xf32>
      %cst_79 = arith.constant 3.200000e+01 : f32
      %157 = vector.broadcast %cst_79 : f32 to vector<16x1xf32>
      %158 = arith.divf %156, %157 : vector<16x1xf32>
      %159 = vector.broadcast %158 : vector<16x1xf32> to vector<16x32xf32>
      %160 = arith.subf %152, %159 : vector<16x32xf32>
      %161 = arith.mulf %160, %160 : vector<16x32xf32>
      %cst_80 = arith.constant dense<0.000000e+00> : vector<16xf32>
      %162 = vector.multi_reduction <add>, %161, %cst_80 [1] : vector<16x32xf32> to vector<16xf32>
      %163 = vector.shape_cast %162 : vector<16xf32> to vector<16x1xf32>
      %cst_81 = arith.constant 3.200000e+01 : f32
      %164 = vector.broadcast %cst_81 : f32 to vector<16x1xf32>
      %165 = arith.divf %163, %164 : vector<16x1xf32>
      %166 = vector.broadcast %158 : vector<16x1xf32> to vector<16x32xf32>
      %167 = arith.subf %152, %166 : vector<16x32xf32>
      %cst_82 = arith.constant 9.99999996E-13 : f32
      %168 = vector.broadcast %cst_82 : f32 to vector<16x1xf32>
      %169 = arith.addf %165, %168 : vector<16x1xf32>
      %170 = math.rsqrt %169 : vector<16x1xf32>
      %171 = vector.broadcast %170 : vector<16x1xf32> to vector<16x32xf32>
      %172 = arith.mulf %167, %171 : vector<16x32xf32>
      %173 = vector.broadcast %153 : vector<1x32xf32> to vector<16x32xf32>
      %174 = arith.mulf %172, %173 : vector<16x32xf32>
      %175 = vector.broadcast %154 : vector<1x32xf32> to vector<16x32xf32>
      %176 = arith.addf %174, %175 : vector<16x32xf32>
      %c0_83 = arith.constant 0 : index
      %c0_84 = arith.constant 0 : index
      %177 = vector.load %arg24[%c0_83, %c0_84] : memref<16x32xf32, #tpu.memory_space<vmem>>, vector<16x32xf32>
      tpu.vector_store %arg24[%c0_83, %c0_84], %176 {strides = array<i32>} : memref<16x32xf32, #tpu.memory_space<vmem>>, vector<16x32xf32>,
    } else {
    }
    %c0 = arith.constant 0 : index
    %c0_1 = arith.constant 0 : index
    %3 = vector.load %arg24[%c0, %c0_1] : memref<16x32xf32, #tpu.memory_space<vmem>>, vector<16x32xf32>
    %c0_2 = arith.constant 0 : index
    %c0_3 = arith.constant 0 : index
    %c0_4 = arith.constant 0 : index
    %4 = vector.load %arg5[%c0_2, %c0_3, %c0_4] : memref<1x1x16xf32, #tpu.memory_space<vmem>>, vector<1x1x16xf32>
    %5 = vector.shape_cast %4 : vector<1x1x16xf32> to vector<1x16xf32>
    %c0_5 = arith.constant 0 : index
    %c0_6 = arith.constant 0 : index
    %c0_7 = arith.constant 0 : index
    %6 = vector.load %arg8[%c0_5, %c0_6, %c0_7] : memref<1x32x96xbf16, #tpu.memory_space<vmem>>, vector<1x32x96xbf16>
    %7 = vector.shape_cast %6 : vector<1x32x96xbf16> to vector<32x96xbf16>
    %c0_8 = arith.constant 0 : index
    %c0_9 = arith.constant 0 : index
    %c0_10 = arith.constant 0 : index
    %8 = vector.load %arg9[%c0_8, %c0_9, %c0_10] : memref<1x1x96xf32, #tpu.memory_space<vmem>>, vector<1x1x96xf32>
    %9 = vector.shape_cast %8 : vector<1x1x96xf32> to vector<1x96xf32>
    %c0_11 = arith.constant 0 : index
    %c0_12 = arith.constant 0 : index
    %c0_13 = arith.constant 0 : index
    %10 = vector.load %arg10[%c0_11, %c0_12, %c0_13] : memref<1x32x32xbf16, #tpu.memory_space<vmem>>, vector<1x32x32xbf16>
    %11 = vector.shape_cast %10 : vector<1x32x32xbf16> to vector<32x32xbf16>
    %c0_14 = arith.constant 0 : index
    %c0_15 = arith.constant 0 : index
    %c0_16 = arith.constant 0 : index
    %12 = vector.load %arg11[%c0_14, %c0_15, %c0_16] : memref<1x1x32xf32, #tpu.memory_space<vmem>>, vector<1x1x32xf32>
    %13 = vector.shape_cast %12 : vector<1x1x32xf32> to vector<1x32xf32>
    %c0_17 = arith.constant 0 : index
    %c0_18 = arith.constant 0 : index
    %c0_19 = arith.constant 0 : index
    %14 = vector.load %arg12[%c0_17, %c0_18, %c0_19] : memref<1x1x32xf32, #tpu.memory_space<vmem>>, vector<1x1x32xf32>
    %15 = vector.shape_cast %14 : vector<1x1x32xf32> to vector<1x32xf32>
    %c0_20 = arith.constant 0 : index
    %c0_21 = arith.constant 0 : index
    %c0_22 = arith.constant 0 : index
    %16 = vector.load %arg13[%c0_20, %c0_21, %c0_22] : memref<1x1x32xf32, #tpu.memory_space<vmem>>, vector<1x1x32xf32>
    %17 = vector.shape_cast %16 : vector<1x1x32xf32> to vector<1x32xf32>
    %c0_23 = arith.constant 0 : index
    %c0_24 = arith.constant 0 : index
    %c0_25 = arith.constant 0 : index
    %18 = vector.load %arg14[%c0_23, %c0_24, %c0_25] : memref<1x32x64xbf16, #tpu.memory_space<vmem>>, vector<1x32x64xbf16>
    %19 = vector.shape_cast %18 : vector<1x32x64xbf16> to vector<32x64xbf16>
    %c0_26 = arith.constant 0 : index
    %c0_27 = arith.constant 0 : index
    %c0_28 = arith.constant 0 : index
    %20 = vector.load %arg15[%c0_26, %c0_27, %c0_28] : memref<1x1x64xf32, #tpu.memory_space<vmem>>, vector<1x1x64xf32>
    %21 = vector.shape_cast %20 : vector<1x1x64xf32> to vector<1x64xf32>
    %c0_29 = arith.constant 0 : index
    %c0_30 = arith.constant 0 : index
    %c0_31 = arith.constant 0 : index
    %22 = vector.load %arg16[%c0_29, %c0_30, %c0_31] : memref<1x64x32xbf16, #tpu.memory_space<vmem>>, vector<1x64x32xbf16>
    %23 = vector.shape_cast %22 : vector<1x64x32xbf16> to vector<64x32xbf16>
    %c0_32 = arith.constant 0 : index
    %c0_33 = arith.constant 0 : index
    %c0_34 = arith.constant 0 : index
    %24 = vector.load %arg17[%c0_32, %c0_33, %c0_34] : memref<1x1x32xf32, #tpu.memory_space<vmem>>, vector<1x1x32xf32>
    %25 = vector.shape_cast %24 : vector<1x1x32xf32> to vector<1x32xf32>
    %c0_35 = arith.constant 0 : index
    %c0_36 = arith.constant 0 : index
    %c0_37 = arith.constant 0 : index
    %26 = vector.load %arg18[%c0_35, %c0_36, %c0_37] : memref<1x1x32xf32, #tpu.memory_space<vmem>>, vector<1x1x32xf32>
    %27 = vector.shape_cast %26 : vector<1x1x32xf32> to vector<1x32xf32>
    %c0_38 = arith.constant 0 : index
    %c0_39 = arith.constant 0 : index
    %c0_40 = arith.constant 0 : index
    %28 = vector.load %arg19[%c0_38, %c0_39, %c0_40] : memref<1x1x32xf32, #tpu.memory_space<vmem>>, vector<1x1x32xf32>
    %29 = vector.shape_cast %28 : vector<1x1x32xf32> to vector<1x32xf32>
    %30 = arith.truncf %3 : vector<16x32xf32> to vector<16x32xbf16>
    %cst = arith.constant dense<0.000000e+00> : vector<16x96xf32>
    %31 = tpu.matmul %30, %7, %cst {dimension_numbers = #tpu.dot_dimension_numbers<[1], [0], [0], [1], [0, 0, 1, 1], [], []>} : vector<16x32xbf16>, vector<32x96xbf16>, vector<16x96xf32> -> vector<16x96xf32>
    %32 = vector.broadcast %9 : vector<1x96xf32> to vector<16x96xf32>
    %33 = arith.addf %31, %32 : vector<16x96xf32>
    %34 = arith.truncf %33 : vector<16x96xf32> to vector<16x96xbf16>
    %35 = vector.extract_strided_slice %34 {offsets = [0, 0], sizes = [16, 16], strides = [1, 1]} : vector<16x96xbf16> to vector<16x16xbf16>
    %36 = vector.extract_strided_slice %34 {offsets = [0, 32], sizes = [16, 16], strides = [1, 1]} : vector<16x96xbf16> to vector<16x16xbf16>
    %37 = vector.extract_strided_slice %34 {offsets = [0, 64], sizes = [16, 16], strides = [1, 1]} : vector<16x96xbf16> to vector<16x16xbf16>
    %cst_41 = arith.constant dense<0.000000e+00> : vector<16x16xf32>
    %38 = tpu.matmul %35, %36, %cst_41 {dimension_numbers = #tpu.dot_dimension_numbers<[1], [1], [0], [0], [0, 0, 1, 0], [], []>} : vector<16x16xbf16>, vector<16x16xbf16>, vector<16x16xf32> -> vector<16x16xf32>
    %cst_42 = arith.constant 2.500000e-01 : f32
    %39 = vector.broadcast %cst_42 : f32 to vector<16x16xf32>
    %40 = arith.mulf %38, %39 : vector<16x16xf32>
    %41 = vector.broadcast %5 : vector<1x16xf32> to vector<16x16xf32>
    %42 = arith.addf %40, %41 : vector<16x16xf32>
    %cst_43 = arith.constant dense<0xFF800000> : vector<16xf32>
    %43 = vector.multi_reduction <maximumf>, %42, %cst_43 [1] : vector<16x16xf32> to vector<16xf32>
    %44 = vector.shape_cast %43 : vector<16xf32> to vector<16x1xf32>
    %45 = vector.broadcast %44 : vector<16x1xf32> to vector<16x16xf32>
    %46 = arith.subf %42, %45 : vector<16x16xf32>
    %47 = math.exp %46 : vector<16x16xf32>
    %cst_44 = arith.constant dense<0.000000e+00> : vector<16xf32>
    %48 = vector.multi_reduction <add>, %47, %cst_44 [1] : vector<16x16xf32> to vector<16xf32>
    %49 = vector.shape_cast %48 : vector<16xf32> to vector<16x1xf32>
    %50 = tpu.reciprocal %49 {approx = true} : vector<16x1xf32> -> vector<16x1xf32>
    %51 = vector.broadcast %50 : vector<16x1xf32> to vector<16x16xf32>
    %52 = arith.mulf %47, %51 : vector<16x16xf32>
    %53 = arith.truncf %52 : vector<16x16xf32> to vector<16x16xbf16>
    %cst_45 = arith.constant dense<0.000000e+00> : vector<16x16xf32>
    %54 = tpu.matmul %53, %37, %cst_45 {dimension_numbers = #tpu.dot_dimension_numbers<[1], [0], [0], [1], [0, 0, 1, 1], [], []>} : vector<16x16xbf16>, vector<16x16xbf16>, vector<16x16xf32> -> vector<16x16xf32>
    %55 = vector.extract_strided_slice %34 {offsets = [0, 16], sizes = [16, 16], strides = [1, 1]} : vector<16x96xbf16> to vector<16x16xbf16>
    %56 = vector.extract_strided_slice %34 {offsets = [0, 48], sizes = [16, 16], strides = [1, 1]} : vector<16x96xbf16> to vector<16x16xbf16>
    %57 = vector.extract_strided_slice %34 {offsets = [0, 80], sizes = [16, 16], strides = [1, 1]} : vector<16x96xbf16> to vector<16x16xbf16>
    %cst_46 = arith.constant dense<0.000000e+00> : vector<16x16xf32>
    %58 = tpu.matmul %55, %56, %cst_46 {dimension_numbers = #tpu.dot_dimension_numbers<[1], [1], [0], [0], [0, 0, 1, 0], [], []>} : vector<16x16xbf16>, vector<16x16xbf16>, vector<16x16xf32> -> vector<16x16xf32>
    %cst_47 = arith.constant 2.500000e-01 : f32
    %59 = vector.broadcast %cst_47 : f32 to vector<16x16xf32>
    %60 = arith.mulf %58, %59 : vector<16x16xf32>
    %61 = vector.broadcast %5 : vector<1x16xf32> to vector<16x16xf32>
    %62 = arith.addf %60, %61 : vector<16x16xf32>
    %cst_48 = arith.constant dense<0xFF800000> : vector<16xf32>
    %63 = vector.multi_reduction <maximumf>, %62, %cst_48 [1] : vector<16x16xf32> to vector<16xf32>
    %64 = vector.shape_cast %63 : vector<16xf32> to vector<16x1xf32>
    %65 = vector.broadcast %64 : vector<16x1xf32> to vector<16x16xf32>
    %66 = arith.subf %62, %65 : vector<16x16xf32>
    %67 = math.exp %66 : vector<16x16xf32>
    %cst_49 = arith.constant dense<0.000000e+00> : vector<16xf32>
    %68 = vector.multi_reduction <add>, %67, %cst_49 [1] : vector<16x16xf32> to vector<16xf32>
    %69 = vector.shape_cast %68 : vector<16xf32> to vector<16x1xf32>
    %70 = tpu.reciprocal %69 {approx = true} : vector<16x1xf32> -> vector<16x1xf32>
    %71 = vector.broadcast %70 : vector<16x1xf32> to vector<16x16xf32>
    %72 = arith.mulf %67, %71 : vector<16x16xf32>
    %73 = arith.truncf %72 : vector<16x16xf32> to vector<16x16xbf16>
    %cst_50 = arith.constant dense<0.000000e+00> : vector<16x16xf32>
    %74 = tpu.matmul %73, %57, %cst_50 {dimension_numbers = #tpu.dot_dimension_numbers<[1], [0], [0], [1], [0, 0, 1, 1], [], []>} : vector<16x16xbf16>, vector<16x16xbf16>, vector<16x16xf32> -> vector<16x16xf32>
    %75 = tpu.concatenate %54, %74 in 1 : vector<16x16xf32>, vector<16x16xf32> -> vector<16x32xf32>
    %76 = arith.truncf %75 : vector<16x32xf32> to vector<16x32xbf16>
    %cst_51 = arith.constant dense<0.000000e+00> : vector<16x32xf32>
    %77 = tpu.matmul %76, %11, %cst_51 {dimension_numbers = #tpu.dot_dimension_numbers<[1], [0], [0], [1], [0, 0, 1, 1], [], []>} : vector<16x32xbf16>, vector<32x32xbf16>, vector<16x32xf32> -> vector<16x32xf32>
    %78 = vector.broadcast %13 : vector<1x32xf32> to vector<16x32xf32>
    %79 = arith.addf %77, %78 : vector<16x32xf32>
    %80 = arith.addf %3, %79 : vector<16x32xf32>
    %cst_52 = arith.constant dense<0.000000e+00> : vector<16xf32>
    %81 = vector.multi_reduction <add>, %80, %cst_52 [1] : vector<16x32xf32> to vector<16xf32>
    %82 = vector.shape_cast %81 : vector<16xf32> to vector<16x1xf32>
    %cst_53 = arith.constant 3.200000e+01 : f32
    %83 = vector.broadcast %cst_53 : f32 to vector<16x1xf32>
    %84 = arith.divf %82, %83 : vector<16x1xf32>
    %85 = vector.broadcast %84 : vector<16x1xf32> to vector<16x32xf32>
    %86 = arith.subf %80, %85 : vector<16x32xf32>
    %87 = arith.mulf %86, %86 : vector<16x32xf32>
    %cst_54 = arith.constant dense<0.000000e+00> : vector<16xf32>
    %88 = vector.multi_reduction <add>, %87, %cst_54 [1] : vector<16x32xf32> to vector<16xf32>
    %89 = vector.shape_cast %88 : vector<16xf32> to vector<16x1xf32>
    %cst_55 = arith.constant 3.200000e+01 : f32
    %90 = vector.broadcast %cst_55 : f32 to vector<16x1xf32>
    %91 = arith.divf %89, %90 : vector<16x1xf32>
    %92 = vector.broadcast %84 : vector<16x1xf32> to vector<16x32xf32>
    %93 = arith.subf %80, %92 : vector<16x32xf32>
    %cst_56 = arith.constant 9.99999996E-13 : f32
    %94 = vector.broadcast %cst_56 : f32 to vector<16x1xf32>
    %95 = arith.addf %91, %94 : vector<16x1xf32>
    %96 = math.rsqrt %95 : vector<16x1xf32>
    %97 = vector.broadcast %96 : vector<16x1xf32> to vector<16x32xf32>
    %98 = arith.mulf %93, %97 : vector<16x32xf32>
    %99 = vector.broadcast %15 : vector<1x32xf32> to vector<16x32xf32>
    %100 = arith.mulf %98, %99 : vector<16x32xf32>
    %101 = vector.broadcast %17 : vector<1x32xf32> to vector<16x32xf32>
    %102 = arith.addf %100, %101 : vector<16x32xf32>
    %103 = arith.truncf %102 : vector<16x32xf32> to vector<16x32xbf16>
    %cst_57 = arith.constant dense<0.000000e+00> : vector<16x64xf32>
    %104 = tpu.matmul %103, %19, %cst_57 {dimension_numbers = #tpu.dot_dimension_numbers<[1], [0], [0], [1], [0, 0, 1, 1], [], []>} : vector<16x32xbf16>, vector<32x64xbf16>, vector<16x64xf32> -> vector<16x64xf32>
    %105 = vector.broadcast %21 : vector<1x64xf32> to vector<16x64xf32>
    %106 = arith.addf %104, %105 : vector<16x64xf32>
    %107 = arith.mulf %106, %106 : vector<16x64xf32>
    %108 = arith.mulf %106, %107 : vector<16x64xf32>
    %cst_58 = arith.constant 4.471500e-02 : f32
    %109 = vector.broadcast %cst_58 : f32 to vector<16x64xf32>
    %110 = arith.mulf %109, %108 : vector<16x64xf32>
    %111 = arith.addf %106, %110 : vector<16x64xf32>
    %cst_59 = arith.constant 0.797884583 : f32
    %112 = vector.broadcast %cst_59 : f32 to vector<16x64xf32>
    %113 = arith.mulf %112, %111 : vector<16x64xf32>
    %114 = math.tanh %113 : vector<16x64xf32>
    %cst_60 = arith.constant 1.000000e+00 : f32
    %115 = vector.broadcast %cst_60 : f32 to vector<16x64xf32>
    %116 = arith.addf %115, %114 : vector<16x64xf32>
    %cst_61 = arith.constant 5.000000e-01 : f32
    %117 = vector.broadcast %cst_61 : f32 to vector<16x64xf32>
    %118 = arith.mulf %117, %116 : vector<16x64xf32>
    %119 = arith.mulf %106, %118 : vector<16x64xf32>
    %120 = arith.truncf %119 : vector<16x64xf32> to vector<16x64xbf16>
    %cst_62 = arith.constant dense<0.000000e+00> : vector<16x32xf32>
    %121 = tpu.matmul %120, %23, %cst_62 {dimension_numbers = #tpu.dot_dimension_numbers<[1], [0], [0], [1], [0, 0, 1, 1], [], []>} : vector<16x64xbf16>, vector<64x32xbf16>, vector<16x32xf32> -> vector<16x32xf32>
    %122 = vector.broadcast %25 : vector<1x32xf32> to vector<16x32xf32>
    %123 = arith.addf %121, %122 : vector<16x32xf32>
    %124 = arith.addf %102, %123 : vector<16x32xf32>
    %cst_63 = arith.constant dense<0.000000e+00> : vector<16xf32>
    %125 = vector.multi_reduction <add>, %124, %cst_63 [1] : vector<16x32xf32> to vector<16xf32>
    %126 = vector.shape_cast %125 : vector<16xf32> to vector<16x1xf32>
    %cst_64 = arith.constant 3.200000e+01 : f32
    %127 = vector.broadcast %cst_64 : f32 to vector<16x1xf32>
    %128 = arith.divf %126, %127 : vector<16x1xf32>
    %129 = vector.broadcast %128 : vector<16x1xf32> to vector<16x32xf32>
    %130 = arith.subf %124, %129 : vector<16x32xf32>
    %131 = arith.mulf %130, %130 : vector<16x32xf32>
    %cst_65 = arith.constant dense<0.000000e+00> : vector<16xf32>
    %132 = vector.multi_reduction <add>, %131, %cst_65 [1] : vector<16x32xf32> to vector<16xf32>
    %133 = vector.shape_cast %132 : vector<16xf32> to vector<16x1xf32>
    %cst_66 = arith.constant 3.200000e+01 : f32
    %134 = vector.broadcast %cst_66 : f32 to vector<16x1xf32>
    %135 = arith.divf %133, %134 : vector<16x1xf32>
    %136 = vector.broadcast %128 : vector<16x1xf32> to vector<16x32xf32>
    %137 = arith.subf %124, %136 : vector<16x32xf32>
    %cst_67 = arith.constant 9.99999996E-13 : f32
    %138 = vector.broadcast %cst_67 : f32 to vector<16x1xf32>
    %139 = arith.addf %135, %138 : vector<16x1xf32>
    %140 = math.rsqrt %139 : vector<16x1xf32>
    %141 = vector.broadcast %140 : vector<16x1xf32> to vector<16x32xf32>
    %142 = arith.mulf %137, %141 : vector<16x32xf32>
    %143 = vector.broadcast %27 : vector<1x32xf32> to vector<16x32xf32>
    %144 = arith.mulf %142, %143 : vector<16x32xf32>
    %145 = vector.broadcast %29 : vector<1x32xf32> to vector<16x32xf32>
    %146 = arith.addf %144, %145 : vector<16x32xf32>
    %c0_68 = arith.constant 0 : index
    %c0_69 = arith.constant 0 : index
    %147 = vector.load %arg24[%c0_68, %c0_69] : memref<16x32xf32, #tpu.memory_space<vmem>>, vector<16x32xf32>
    tpu.vector_store %arg24[%c0_68, %c0_69], %146 {strides = array<i32>} : memref<16x32xf32, #tpu.memory_space<vmem>>, vector<16x32xf32>,
    %c1_i32 = arith.constant 1 : i32
    %148 = arith.cmpi eq, %arg1, %c1_i32 : i32
    %149 = arith.extui %148 : i1 to i32
    %c0_i32_70 = arith.constant 0 : i32
    %150 = arith.cmpi ne, %149, %c0_i32_70 : i32
    scf.if %150 {
      %c0_71 = arith.constant 0 : index
      %c0_72 = arith.constant 0 : index
      %151 = vector.load %arg20[%c0_71, %c0_72] : memref<2x32xbf16, #tpu.memory_space<vmem>>, vector<2x32xbf16>
      %152 = arith.truncf %146 : vector<16x32xf32> to vector<16x32xbf16>
      %cst_73 = arith.constant dense<0.000000e+00> : vector<2x16xf32>
      %153 = tpu.matmul %151, %152, %cst_73 {dimension_numbers = #tpu.dot_dimension_numbers<[1], [1], [0], [0], [0, 0, 1, 0], [], []>} : vector<2x32xbf16>, vector<16x32xbf16>, vector<2x16xf32> -> vector<2x16xf32>
      %c0_74 = arith.constant 0 : index
      %c0_75 = arith.constant 0 : index
      %154 = vector.load %arg21[%c0_74, %c0_75] : memref<2x1xf32, #tpu.memory_space<vmem>>, vector<2x1xf32>
      %155 = vector.broadcast %154 : vector<2x1xf32> to vector<2x16xf32>
      %156 = arith.addf %153, %155 : vector<2x16xf32>
      %cst_76 = arith.constant 0.000000e+00 : f32
      %157 = vector.broadcast %cst_76 : f32 to vector<2x112xf32>
      %158 = tpu.concatenate %156, %157 in 1 : vector<2x16xf32>, vector<2x112xf32> -> vector<2x128xf32>
      %c0_77 = arith.constant 0 : index
      %c0_78 = arith.constant 0 : index
      %c0_79 = arith.constant 0 : index
      %159 = vector.load %arg22[%c0_77, %c0_78, %c0_79] : memref<1x2x128xf32, #tpu.memory_space<vmem>>, vector<1x2x128xf32>
      %160 = vector.shape_cast %159 : vector<1x2x128xf32> to vector<2x128xf32>
      %161 = vector.shape_cast %158 : vector<2x128xf32> to vector<1x2x128xf32>
      tpu.vector_store %arg22[%c0_77, %c0_78, %c0_79], %161 {strides = array<i32>} : memref<1x2x128xf32, #tpu.memory_space<vmem>>, vector<1x2x128xf32>,
      %162 = tpu.iota {dimensions = array<i32: 1>} : vector<1x16xi32>
      %163 = vector.extract_strided_slice %156 {offsets = [0, 0], sizes = [1, 16], strides = [1, 1]} : vector<2x16xf32> to vector<1x16xf32>
      %164 = arith.index_cast %arg0 : i32 to index
      %165 = memref.load %arg2[%164] : memref<2xi32, #tpu.memory_space<smem>>
      %c0_i32_80 = arith.constant 0 : i32
      %c16_i32 = arith.constant 16 : i32
      %166 = arith.maxsi %c0_i32_80, %165 : i32
      %167 = arith.minsi %c16_i32, %166 : i32
      %168 = vector.shape_cast %163 : vector<1x16xf32> to vector<1x1x16xf32>
      %cst_81 = arith.constant dense<0xFF800000> : vector<1xf32>
      %169 = vector.multi_reduction <maximumf>, %168, %cst_81 [1, 2] : vector<1x1x16xf32> to vector<1xf32>
      %170 = vector.shape_cast %169 : vector<1xf32> to vector<1x1x1xf32>
      %171 = vector.extract %170[0, 0, 0] : f32 from vector<1x1x1xf32>
      %172 = vector.broadcast %171 : f32 to vector<1x16xf32>
      %173 = arith.subf %163, %172 : vector<1x16xf32>
      %174 = math.exp %173 : vector<1x16xf32>
      %175 = vector.shape_cast %174 : vector<1x16xf32> to vector<1x1x16xf32>
      %cst_82 = arith.constant dense<0.000000e+00> : vector<1xf32>
      %176 = vector.multi_reduction <add>, %175, %cst_82 [1, 2] : vector<1x1x16xf32> to vector<1xf32>
      %177 = vector.shape_cast %176 : vector<1xf32> to vector<1x1x1xf32>
      %178 = vector.extract %177[0, 0, 0] : f32 from vector<1x1x1xf32>
      %179 = math.log %178 : f32
      %180 = arith.addf %179, %171 : f32
      %181 = vector.broadcast %167 : i32 to vector<1x16xi32>
      %182 = arith.cmpi eq, %162, %181 : vector<1x16xi32>
      %cst_83 = arith.constant 0.000000e+00 : f32
      %183 = vector.broadcast %cst_83 : f32 to vector<1x16xf32>
      %184 = arith.select %182, %163, %183 : vector<1x16xi1>, vector<1x16xf32>
      %185 = vector.shape_cast %184 : vector<1x16xf32> to vector<1x1x16xf32>
      %cst_84 = arith.constant dense<0.000000e+00> : vector<1xf32>
      %186 = vector.multi_reduction <add>, %185, %cst_84 [1, 2] : vector<1x1x16xf32> to vector<1xf32>
      %187 = vector.shape_cast %186 : vector<1xf32> to vector<1x1x1xf32>
      %188 = vector.extract %187[0, 0, 0] : f32 from vector<1x1x1xf32>
      %c16_i32_85 = arith.constant 16 : i32
      %189 = arith.cmpi ne, %167, %c16_i32_85 : i32
      %190 = arith.extui %189 : i1 to i32
      %191 = arith.sitofp %190 : i32 to f32
      %192 = arith.subf %180, %188 : f32
      %193 = arith.mulf %192, %191 : f32
      %194 = vector.extract_strided_slice %156 {offsets = [1, 0], sizes = [1, 16], strides = [1, 1]} : vector<2x16xf32> to vector<1x16xf32>
      %195 = arith.index_cast %arg0 : i32 to index
      %196 = memref.load %arg3[%195] : memref<2xi32, #tpu.memory_space<smem>>
      %c0_i32_86 = arith.constant 0 : i32
      %c16_i32_87 = arith.constant 16 : i32
      %197 = arith.maxsi %c0_i32_86, %196 : i32
      %198 = arith.minsi %c16_i32_87, %197 : i32
      %199 = vector.shape_cast %194 : vector<1x16xf32> to vector<1x1x16xf32>
      %cst_88 = arith.constant dense<0xFF800000> : vector<1xf32>
      %200 = vector.multi_reduction <maximumf>, %199, %cst_88 [1, 2] : vector<1x1x16xf32> to vector<1xf32>
      %201 = vector.shape_cast %200 : vector<1xf32> to vector<1x1x1xf32>
      %202 = vector.extract %201[0, 0, 0] : f32 from vector<1x1x1xf32>
      %203 = vector.broadcast %202 : f32 to vector<1x16xf32>
      %204 = arith.subf %194, %203 : vector<1x16xf32>
      %205 = math.exp %204 : vector<1x16xf32>
      %206 = vector.shape_cast %205 : vector<1x16xf32> to vector<1x1x16xf32>
      %cst_89 = arith.constant dense<0.000000e+00> : vector<1xf32>
      %207 = vector.multi_reduction <add>, %206, %cst_89 [1, 2] : vector<1x1x16xf32> to vector<1xf32>
      %208 = vector.shape_cast %207 : vector<1xf32> to vector<1x1x1xf32>
      %209 = vector.extract %208[0, 0, 0] : f32 from vector<1x1x1xf32>
      %210 = math.log %209 : f32
      %211 = arith.addf %210, %202 : f32
      %212 = vector.broadcast %198 : i32 to vector<1x16xi32>
      %213 = arith.cmpi eq, %162, %212 : vector<1x16xi32>
      %cst_90 = arith.constant 0.000000e+00 : f32
      %214 = vector.broadcast %cst_90 : f32 to vector<1x16xf32>
      %215 = arith.select %213, %194, %214 : vector<1x16xi1>, vector<1x16xf32>
      %216 = vector.shape_cast %215 : vector<1x16xf32> to vector<1x1x16xf32>
      %cst_91 = arith.constant dense<0.000000e+00> : vector<1xf32>
      %217 = vector.multi_reduction <add>, %216, %cst_91 [1, 2] : vector<1x1x16xf32> to vector<1xf32>
      %218 = vector.shape_cast %217 : vector<1xf32> to vector<1x1x1xf32>
      %219 = vector.extract %218[0, 0, 0] : f32 from vector<1x1x1xf32>
      %c16_i32_92 = arith.constant 16 : i32
      %220 = arith.cmpi ne, %198, %c16_i32_92 : i32
      %221 = arith.extui %220 : i1 to i32
      %222 = arith.sitofp %221 : i32 to f32
      %223 = arith.subf %211, %219 : f32
      %224 = arith.mulf %223, %222 : f32
      %225 = tpu.iota {dimensions = array<i32: 1>} : vector<1x128xi32>
      %c0_i32_93 = arith.constant 0 : i32
      %226 = vector.broadcast %c0_i32_93 : i32 to vector<1x128xi32>
      %227 = arith.cmpi eq, %225, %226 : vector<1x128xi32>
      %cst_94 = arith.constant 0.000000e+00 : f32
      %228 = vector.broadcast %193 : f32 to vector<1x128xf32>
      %229 = vector.broadcast %cst_94 : f32 to vector<1x128xf32>
      %230 = arith.select %227, %228, %229 : vector<1x128xi1>, vector<1x128xf32>
      %c1_i32_95 = arith.constant 1 : i32
      %231 = vector.broadcast %c1_i32_95 : i32 to vector<1x128xi32>
      %232 = arith.cmpi eq, %225, %231 : vector<1x128xi32>
      %cst_96 = arith.constant 0.000000e+00 : f32
      %233 = vector.broadcast %191 : f32 to vector<1x128xf32>
      %234 = vector.broadcast %cst_96 : f32 to vector<1x128xf32>
      %235 = arith.select %232, %233, %234 : vector<1x128xi1>, vector<1x128xf32>
      %236 = arith.addf %230, %235 : vector<1x128xf32>
      %c2_i32 = arith.constant 2 : i32
      %237 = vector.broadcast %c2_i32 : i32 to vector<1x128xi32>
      %238 = arith.cmpi eq, %225, %237 : vector<1x128xi32>
      %cst_97 = arith.constant 0.000000e+00 : f32
      %239 = vector.broadcast %224 : f32 to vector<1x128xf32>
      %240 = vector.broadcast %cst_97 : f32 to vector<1x128xf32>
      %241 = arith.select %238, %239, %240 : vector<1x128xi1>, vector<1x128xf32>
      %242 = arith.addf %236, %241 : vector<1x128xf32>
      %c3_i32 = arith.constant 3 : i32
      %243 = vector.broadcast %c3_i32 : i32 to vector<1x128xi32>
      %244 = arith.cmpi eq, %225, %243 : vector<1x128xi32>
      %cst_98 = arith.constant 0.000000e+00 : f32
      %245 = vector.broadcast %222 : f32 to vector<1x128xf32>
      %246 = vector.broadcast %cst_98 : f32 to vector<1x128xf32>
      %247 = arith.select %244, %245, %246 : vector<1x128xi1>, vector<1x128xf32>
      %248 = arith.addf %242, %247 : vector<1x128xf32>
      %c0_99 = arith.constant 0 : index
      %c0_100 = arith.constant 0 : index
      %c0_101 = arith.constant 0 : index
      %249 = vector.load %arg23[%c0_99, %c0_100, %c0_101] : memref<1x1x128xf32, #tpu.memory_space<vmem>>, vector<1x1x128xf32>
      %250 = vector.shape_cast %249 : vector<1x1x128xf32> to vector<1x128xf32>
      %251 = vector.shape_cast %248 : vector<1x128xf32> to vector<1x1x128xf32>
      tpu.vector_store %arg23[%c0_99, %c0_100, %c0_101], %251 {strides = array<i32>} : memref<1x1x128xf32, #tpu.memory_space<vmem>>, vector<1x1x128xf32>,
    } else {
    }
    return
  }
  func.func @transform_0(%arg0: i32, %arg1: i32, %arg2: memref<2xi32, #tpu.memory_space<smem>>, %arg3: memref<2xi32, #tpu.memory_space<smem>>) -> (i32, i32, i32) {
    %c0_i32 = arith.constant 0 : i32
    %c0_i32_0 = arith.constant 0 : i32
    %c0_i32_1 = arith.constant 0 : i32
    return %arg0, %c0_i32, %c0_i32_0 : i32, i32, i32
  }
  func.func @transform_1(%arg0: i32, %arg1: i32, %arg2: memref<2xi32, #tpu.memory_space<smem>>, %arg3: memref<2xi32, #tpu.memory_space<smem>>) -> (i32, i32, i32) {
    %c0_i32 = arith.constant 0 : i32
    %c0_i32_0 = arith.constant 0 : i32
    %c0_i32_1 = arith.constant 0 : i32
    return %arg0, %c0_i32, %c0_i32_0 : i32, i32, i32
  }
  func.func @transform_2(%arg0: i32, %arg1: i32, %arg2: memref<2xi32, #tpu.memory_space<smem>>, %arg3: memref<2xi32, #tpu.memory_space<smem>>) -> (i32, i32) {
    %c0_i32 = arith.constant 0 : i32
    %c0_i32_0 = arith.constant 0 : i32
    %c0_i32_1 = arith.constant 0 : i32
    return %c0_i32, %c0_i32_0 : i32, i32
  }
  func.func @transform_3(%arg0: i32, %arg1: i32, %arg2: memref<2xi32, #tpu.memory_space<smem>>, %arg3: memref<2xi32, #tpu.memory_space<smem>>) -> (i32, i32) {
    %c0_i32 = arith.constant 0 : i32
    %c0_i32_0 = arith.constant 0 : i32
    %c0_i32_1 = arith.constant 0 : i32
    return %c0_i32, %c0_i32_0 : i32, i32
  }
  func.func @transform_4(%arg0: i32, %arg1: i32, %arg2: memref<2xi32, #tpu.memory_space<smem>>, %arg3: memref<2xi32, #tpu.memory_space<smem>>) -> (i32, i32, i32) {
    %c0_i32 = arith.constant 0 : i32
    %c0_i32_0 = arith.constant 0 : i32
    %c0_i32_1 = arith.constant 0 : i32
    return %arg1, %c0_i32, %c0_i32_0 : i32, i32, i32
  }
  func.func @transform_5(%arg0: i32, %arg1: i32, %arg2: memref<2xi32, #tpu.memory_space<smem>>, %arg3: memref<2xi32, #tpu.memory_space<smem>>) -> (i32, i32, i32) {
    %c0_i32 = arith.constant 0 : i32
    %c0_i32_0 = arith.constant 0 : i32
    %c0_i32_1 = arith.constant 0 : i32
    return %arg1, %c0_i32, %c0_i32_0 : i32, i32, i32
  }
  func.func @transform_6(%arg0: i32, %arg1: i32, %arg2: memref<2xi32, #tpu.memory_space<smem>>, %arg3: memref<2xi32, #tpu.memory_space<smem>>) -> (i32, i32, i32) {
    %c0_i32 = arith.constant 0 : i32
    %c0_i32_0 = arith.constant 0 : i32
    %c0_i32_1 = arith.constant 0 : i32
    return %arg1, %c0_i32, %c0_i32_0 : i32, i32, i32
  }
  func.func @transform_7(%arg0: i32, %arg1: i32, %arg2: memref<2xi32, #tpu.memory_space<smem>>, %arg3: memref<2xi32, #tpu.memory_space<smem>>) -> (i32, i32, i32) {
    %c0_i32 = arith.constant 0 : i32
    %c0_i32_0 = arith.constant 0 : i32
    %c0_i32_1 = arith.constant 0 : i32
    return %arg1, %c0_i32, %c0_i32_0 : i32, i32, i32
  }
  func.func @transform_8(%arg0: i32, %arg1: i32, %arg2: memref<2xi32, #tpu.memory_space<smem>>, %arg3: memref<2xi32, #tpu.memory_space<smem>>) -> (i32, i32, i32) {
    %c0_i32 = arith.constant 0 : i32
    %c0_i32_0 = arith.constant 0 : i32
    %c0_i32_1 = arith.constant 0 : i32
    return %arg1, %c0_i32, %c0_i32_0 : i32, i32, i32
  }
  func.func @transform_9(%arg0: i32, %arg1: i32, %arg2: memref<2xi32, #tpu.memory_space<smem>>, %arg3: memref<2xi32, #tpu.memory_space<smem>>) -> (i32, i32, i32) {
    %c0_i32 = arith.constant 0 : i32
    %c0_i32_0 = arith.constant 0 : i32
    %c0_i32_1 = arith.constant 0 : i32
    return %arg1, %c0_i32, %c0_i32_0 : i32, i32, i32
  }
  func.func @transform_10(%arg0: i32, %arg1: i32, %arg2: memref<2xi32, #tpu.memory_space<smem>>, %arg3: memref<2xi32, #tpu.memory_space<smem>>) -> (i32, i32, i32) {
    %c0_i32 = arith.constant 0 : i32
    %c0_i32_0 = arith.constant 0 : i32
    %c0_i32_1 = arith.constant 0 : i32
    return %arg1, %c0_i32, %c0_i32_0 : i32, i32, i32
  }
  func.func @transform_11(%arg0: i32, %arg1: i32, %arg2: memref<2xi32, #tpu.memory_space<smem>>, %arg3: memref<2xi32, #tpu.memory_space<smem>>) -> (i32, i32, i32) {
    %c0_i32 = arith.constant 0 : i32
    %c0_i32_0 = arith.constant 0 : i32
    %c0_i32_1 = arith.constant 0 : i32
    return %arg1, %c0_i32, %c0_i32_0 : i32, i32, i32
  }
  func.func @transform_12(%arg0: i32, %arg1: i32, %arg2: memref<2xi32, #tpu.memory_space<smem>>, %arg3: memref<2xi32, #tpu.memory_space<smem>>) -> (i32, i32, i32) {
    %c0_i32 = arith.constant 0 : i32
    %c0_i32_0 = arith.constant 0 : i32
    %c0_i32_1 = arith.constant 0 : i32
    return %arg1, %c0_i32, %c0_i32_0 : i32, i32, i32
  }
  func.func @transform_13(%arg0: i32, %arg1: i32, %arg2: memref<2xi32, #tpu.memory_space<smem>>, %arg3: memref<2xi32, #tpu.memory_space<smem>>) -> (i32, i32, i32) {
    %c0_i32 = arith.constant 0 : i32
    %c0_i32_0 = arith.constant 0 : i32
    %c0_i32_1 = arith.constant 0 : i32
    return %arg1, %c0_i32, %c0_i32_0 : i32, i32, i32
  }
  func.func @transform_14(%arg0: i32, %arg1: i32, %arg2: memref<2xi32, #tpu.memory_space<smem>>, %arg3: memref<2xi32, #tpu.memory_space<smem>>) -> (i32, i32, i32) {
    %c0_i32 = arith.constant 0 : i32
    %c0_i32_0 = arith.constant 0 : i32
    %c0_i32_1 = arith.constant 0 : i32
    return %arg1, %c0_i32, %c0_i32_0 : i32, i32, i32
  }
  func.func @transform_15(%arg0: i32, %arg1: i32, %arg2: memref<2xi32, #tpu.memory_space<smem>>, %arg3: memref<2xi32, #tpu.memory_space<smem>>) -> (i32, i32, i32) {
    %c0_i32 = arith.constant 0 : i32
    %c0_i32_0 = arith.constant 0 : i32
    %c0_i32_1 = arith.constant 0 : i32
    return %arg1, %c0_i32, %c0_i32_0 : i32, i32, i32
  }
  func.func @transform_16(%arg0: i32, %arg1: i32, %arg2: memref<2xi32, #tpu.memory_space<smem>>, %arg3: memref<2xi32, #tpu.memory_space<smem>>) -> (i32, i32) {
    %c0_i32 = arith.constant 0 : i32
    %c0_i32_0 = arith.constant 0 : i32
    %c0_i32_1 = arith.constant 0 : i32
    return %c0_i32, %c0_i32_0 : i32, i32
  }
  func.func @transform_17(%arg0: i32, %arg1: i32, %arg2: memref<2xi32, #tpu.memory_space<smem>>, %arg3: memref<2xi32, #tpu.memory_space<smem>>) -> (i32, i32) {
    %c0_i32 = arith.constant 0 : i32
    %c0_i32_0 = arith.constant 0 : i32
    %c0_i32_1 = arith.constant 0 : i32
    return %c0_i32, %c0_i32_0 : i32, i32
  }
  func.func @transform_18(%arg0: i32, %arg1: i32, %arg2: memref<2xi32, #tpu.memory_space<smem>>, %arg3: memref<2xi32, #tpu.memory_space<smem>>) -> (i32, i32, i32) {
    %c0_i32 = arith.constant 0 : i32
    %c0_i32_0 = arith.constant 0 : i32
    %c0_i32_1 = arith.constant 0 : i32
    return %arg0, %c0_i32, %c0_i32_0 : i32, i32, i32
  }
  func.func @transform_19(%arg0: i32, %arg1: i32, %arg2: memref<2xi32, #tpu.memory_space<smem>>, %arg3: memref<2xi32, #tpu.memory_space<smem>>) -> (i32, i32, i32) {
    %c0_i32 = arith.constant 0 : i32
    %c0_i32_0 = arith.constant 0 : i32
    %c0_i32_1 = arith.constant 0 : i32
    return %arg0, %c0_i32, %c0_i32_0 : i32, i32, i32
  }
}

</mosaic_0001>

<llo_original>
// kernel: tpu_custom_call.1
$region0: #{tpu_custom_call.1}
  #allocation0 [shape = 'u32[]', space=smem, size = 0x4, offset = 0x4, fixed_abs, tag = 'smem constant byte address 0x4 - core index']
  #allocation1 [shape = 'u32[144,128]{1,0:T(1,128)}', space=vmem, size = 0x12000, scoped, tag = 'internal scratch']
  #allocation2 [shape = 'f32[16,32]{1,0:T(8,128)}', space=vmem, size = 0x2000, scoped, tag = 'scratch operand']
  #allocation3 [shape = 's32[1]{0}', space=sflag, size = 0x4, scoped, tag = 'scoped memory for tpu_custom_call.1']
  #allocation4 [shape = 'u8[512]{0}', space=smem, size = 0x200, scoped, tag = 'prefetched SMEM operand 0']
  #allocation5 [shape = 'u8[512]{0}', space=smem, size = 0x200, scoped, tag = 'prefetched SMEM operand 1']
  %s0 = inlined_call_operand.hbm [shape: s32[2], index: 0, kind: input, shape index: {}]
  %s1 = inlined_call_operand.hbm [shape: s32[2], index: 1, kind: input, shape index: {}]
  %s2 = inlined_call_operand.vmem [shape: f32[2,16,32], index: 2, kind: input, shape index: {}]
  %s3 = inlined_call_operand.vmem [shape: f32[2,1,16], index: 3, kind: input, shape index: {}]
  %s4 = inlined_call_operand.hbm [shape: f32[1,32], index: 4, kind: input, shape index: {}]
  %s5 = inlined_call_operand.hbm [shape: f32[1,32], index: 5, kind: input, shape index: {}]
  %s6 = inlined_call_operand.vmem [shape: bf16[2,32,96], index: 6, kind: input, shape index: {}]
  %s7 = inlined_call_operand.vmem [shape: f32[2,1,96], index: 7, kind: input, shape index: {}]
  %s8 = inlined_call_operand.vmem [shape: bf16[2,32,32], index: 8, kind: input, shape index: {}]
  %s9 = inlined_call_operand.vmem [shape: f32[2,1,32], index: 9, kind: input, shape index: {}]
  %s10 = inlined_call_operand.vmem [shape: f32[2,1,32], index: 10, kind: input, shape index: {}]
  %s11 = inlined_call_operand.vmem [shape: f32[2,1,32], index: 11, kind: input, shape index: {}]
  %s12 = inlined_call_operand.hbm [shape: bf16[2,32,64], index: 12, kind: input, shape index: {}]
  %s13 = inlined_call_operand.vmem [shape: f32[2,1,64], index: 13, kind: input, shape index: {}]
  %s14 = inlined_call_operand.vmem [shape: bf16[2,64,32], index: 14, kind: input, shape index: {}]
  %s15 = inlined_call_operand.vmem [shape: f32[2,1,32], index: 15, kind: input, shape index: {}]
  %s16 = inlined_call_operand.vmem [shape: f32[2,1,32], index: 16, kind: input, shape index: {}]
  %s17 = inlined_call_operand.vmem [shape: f32[2,1,32], index: 17, kind: input, shape index: {}]
  %s18 = inlined_call_operand.vmem [shape: bf16[2,32], index: 18, kind: input, shape index: {}]
  %s19 = inlined_call_operand.vmem [shape: f32[2,1], index: 19, kind: input, shape index: {}]
  %s20 = inlined_call_operand.hbm [shape: f32[2,2,128], index: 20, kind: output, shape index: {0}]
  %s21 = inlined_call_operand.hbm [shape: f32[2,1,128], index: 21, kind: output, shape index: {1}]
  %22 = xla_tuple %s20, %s21
  %s23 = sld [smem:[#allocation0]]
  $region133: #{tpu_custom_call.1} parent=0
    _
  %s25 = ssub.s32 1, %s23
  %s26 = scalar_select 0, %s25, %s23
  %28 = dma.hbm_to_smem %s0, 16, [#allocation4], [#allocation3]
  %30 = dma.hbm_to_smem %s1, 16, [#allocation5], [#allocation3]
  %31 = dma.done [#allocation3], 32
  %32 = sfence
  $region1: #{tpu_custom_call.1} parent=0
    #allocation6 [shape = 'u8[512]{0}', space=vmem, size = 0x400, scoped, tag = 'input window, operand 4, single buffered']
    #allocation7 [shape = 's32[2]{0}', space=sflag, size = 0x8, scoped, tag = 'scoped memory for tpu_custom_call.1']
    #allocation8 [shape = 's32[2]{0}', space=sflag, size = 0x8, scoped, tag = 'scoped memory for tpu_custom_call.1']
    #allocation9 [shape = 'u8[512]{0}', space=vmem, size = 0x400, scoped, tag = 'input window, operand 5, single buffered']
    #allocation10 [shape = 's32[1]{0}', space=sflag, size = 0x4, scoped, tag = 'scoped memory for tpu_custom_call.1']
    #allocation11 [shape = 'u8[16384]{0}', space=vmem, size = 0x4000, scoped, tag = 'input window, operand 12']
    #allocation12 [shape = 'u8[2048]{0}', space=vmem, size = 0x800, scoped, tag = 'output window, operand 0']
    #allocation13 [shape = 'u8[1024]{0}', space=vmem, size = 0x400, scoped, tag = 'output window, operand 1']
    #allocation14 [shape = 's32[2]{0}', space=sflag, size = 0x8, scoped, tag = 'scoped memory for tpu_custom_call.1']
    %33 = vsyncpa [#allocation7], 0
    %34 = vsyncpa [#allocation10], 0
    %35 = vsyncpa [#allocation8], 0
    %s36 = scalar_lea.sflag [#allocation8], 1
    %37 = vsyncpa %s36, 0
    %38 = vsyncpa [#allocation14], 0
    %s39 = scalar_lea.sflag [#allocation14], 1
    %40 = vsyncpa %s39, 0
    loop: start=0, step=1, limit=6
    $region2: #{tpu_custom_call.1} parent=1 // loop_pre_header
      _
    $region3: #{tpu_custom_call.1} parent=1 // loop_header
      %s42 = sphi 0, %s46
      %p43 = scmp.ge.s32.totalorder %s42, 6
      %s49 = sphi 0, %s61
      %s50 = sphi 0, %s57
      %s51 = sphi 0, %s49
      %s52 = sphi 0, %s50
      %s53 = sphi 0, %s51
      %s54 = sphi 0, %s52
      %s64 = sphi 0, %s66
      %s67 = sphi 0, %s64
      %s68 = sphi 0, %s67
      %s84 = sphi 0, %s68
      %s90 = sphi 0, %s92
      %s93 = sphi 0, %s90
      %s94 = sphi 0, %s93
      %s110 = sphi 0, %s94
      %s114 = sphi 0, %s114
      %s116 = sphi 0, %s114
      %s117 = sphi 0, %s116
      %s131 = sphi 0, %s117
      %s135 = sphi 0, %s135
      %s137 = sphi 0, %s135
      %s138 = sphi 0, %s137
      %s152 = sphi 0, %s138
      %s158 = sphi 0, %s160
      %s161 = sphi 0, %s158
      %s162 = sphi 0, %s161
      %s178 = sphi 0, %s162
      %s184 = sphi 0, %s186
      %s187 = sphi 0, %s184
      %s188 = sphi 0, %s187
      %s204 = sphi 0, %s188
      %s210 = sphi 0, %s212
      %s213 = sphi 0, %s210
      %s214 = sphi 0, %s213
      %s230 = sphi 0, %s214
      %s236 = sphi 0, %s238
      %s239 = sphi 0, %s236
      %s240 = sphi 0, %s239
      %s256 = sphi 0, %s240
      %s262 = sphi 0, %s264
      %s265 = sphi 0, %s262
      %s266 = sphi 0, %s265
      %s282 = sphi 0, %s266
      %s288 = sphi 0, %s290
      %s291 = sphi 0, %s288
      %s292 = sphi 0, %s291
      %s308 = sphi 0, %s292
      %s314 = sphi 0, %s316
      %s317 = sphi 0, %s314
      %s318 = sphi 0, %s317
      %s334 = sphi 0, %s318
      %s340 = sphi 0, %s342
      %s343 = sphi 0, %s340
      %s344 = sphi 0, %s343
      %s360 = sphi 0, %s344
      %s366 = sphi 0, %s368
      %s369 = sphi 0, %s366
      %s370 = sphi 0, %s369
      %s386 = sphi 0, %s370
      %s392 = sphi 0, %s394
      %s395 = sphi 0, %s392
      %s396 = sphi 0, %s395
      %s412 = sphi 0, %s396
      %s418 = sphi 0, %s420
      %s421 = sphi 0, %s418
      %s422 = sphi 0, %s421
      %s438 = sphi 0, %s422
      %s444 = sphi 0, %s446
      %s447 = sphi 0, %s444
      %s448 = sphi 0, %s447
      %s464 = sphi 0, %s448
      %s468 = sphi 0, %s468
      %s470 = sphi 0, %s468
      %s471 = sphi 0, %s470
      %s485 = sphi 0, %s471
      %s489 = sphi 0, %s489
      %s491 = sphi 0, %s489
      %s492 = sphi 0, %s491
      %s506 = sphi 0, %s492
      %s512 = sphi 0, %s514
      %s515 = sphi 0, %s512
      %s516 = sphi 0, %s515
      %s532 = sphi 0, %s516
      %s538 = sphi 0, %s540
      %s541 = sphi 0, %s538
      %s542 = sphi 0, %s541
      %s558 = sphi 0, %s542
    $region4: #{tpu_custom_call.1} parent=1 // loop_header_branch
      %45 = sbr.rel (%p43) target = $region8
    $region5: #{tpu_custom_call.1} parent=1 // loop_body
      %s47 = ssub.s32 %s42, 1
      %s48 = ssub.s32 %s42, 2
      %s55 = sadd.s32 1, %s50
      %p56 = scmp.ge.s32.totalorder %s55, 2
      %s57 = scalar_select %p56, 0, %s55
      %s58 = sadd.s32 1, %s49
      %s59 = scalar_select %p56, %s58, %s49
      %p60 = scmp.ge.s32.totalorder %s59, 2
      %s61 = scalar_select %p60, 0, %s59
      %s62 = ssub.s32 %s49, %s61
      %p63 = scmp.eq.s32.totalorder %s62, 0
      %s65 = sadd.s32 %s64, 1
      %s66 = scalar_select %p63, %s64, %s65
      %p69 = pneg %p63
      %p70 = scmp.eq.s32.totalorder %s42, 3
      %p71 = por %p69, %p70
      %p72 = scmp.ne.s32.totalorder %s64, %s67
      %p73 = scmp.eq.s32.totalorder %s42, 0
      %p74 = por %p72, %p73
      %p75 = scmp.ne.s32.totalorder %s64, %s67
      %p76 = scmp.eq.s32.totalorder %s47, 3
      %p77 = por %p75, %p76
      %p78 = scmp.ne.s32.totalorder %s67, %s68
      %p79 = scmp.eq.s32.totalorder %s47, 0
      %p80 = por %p78, %p79
      %p81 = scmp.ne.s32.totalorder %s67, %s68
      %p82 = scmp.eq.s32.totalorder %s48, 3
      %p83 = por %p81, %p82
      %p85 = scmp.ne.s32.totalorder %s68, %s84
      %p86 = scmp.eq.s32.totalorder %s48, 0
      %p87 = por %p85, %p86
      %s88 = ssub.s32 %s49, %s61
      %p89 = scmp.eq.s32.totalorder %s88, 0
      %s91 = sadd.s32 %s90, 1
      %s92 = scalar_select %p89, %s90, %s91
      %p95 = pneg %p89
      %p96 = scmp.eq.s32.totalorder %s42, 3
      %p97 = por %p95, %p96
      %p98 = scmp.ne.s32.totalorder %s90, %s93
      %p99 = scmp.eq.s32.totalorder %s42, 0
      %p100 = por %p98, %p99
      %p101 = scmp.ne.s32.totalorder %s90, %s93
      %p102 = scmp.eq.s32.totalorder %s47, 3
      %p103 = por %p101, %p102
      %p104 = scmp.ne.s32.totalorder %s93, %s94
      %p105 = scmp.eq.s32.totalorder %s47, 0
      %p106 = por %p104, %p105
      %p107 = scmp.ne.s32.totalorder %s93, %s94
      %p108 = scmp.eq.s32.totalorder %s48, 3
      %p109 = por %p107, %p108
      %p111 = scmp.ne.s32.totalorder %s94, %s110
      %p112 = scmp.eq.s32.totalorder %s48, 0
      %p113 = por %p111, %p112
      %s115 = sadd.s32 %s114, 1
      %p118 = scmp.eq.s32.totalorder %s42, 3
      %p119 = scmp.ne.s32.totalorder %s114, %s116
      %p120 = scmp.eq.s32.totalorder %s42, 0
      %p121 = por %p119, %p120
      %p122 = scmp.ne.s32.totalorder %s114, %s116
      %p123 = scmp.eq.s32.totalorder %s47, 3
      %p124 = por %p122, %p123
      %p125 = scmp.ne.s32.totalorder %s116, %s117
      %p126 = scmp.eq.s32.totalorder %s47, 0
      %p127 = por %p125, %p126
      %p128 = scmp.ne.s32.totalorder %s116, %s117
      %p129 = scmp.eq.s32.totalorder %s48, 3
      %p130 = por %p128, %p129
      %p132 = scmp.ne.s32.totalorder %s117, %s131
      %p133 = scmp.eq.s32.totalorder %s48, 0
      %p134 = por %p132, %p133
      %s136 = sadd.s32 %s135, 1
      %p139 = scmp.eq.s32.totalorder %s42, 3
      %p140 = scmp.ne.s32.totalorder %s135, %s137
      %p141 = scmp.eq.s32.totalorder %s42, 0
      %p142 = por %p140, %p141
      %p143 = scmp.ne.s32.totalorder %s135, %s137
      %p144 = scmp.eq.s32.totalorder %s47, 3
      %p145 = por %p143, %p144
      %p146 = scmp.ne.s32.totalorder %s137, %s138
      %p147 = scmp.eq.s32.totalorder %s47, 0
      %p148 = por %p146, %p147
      %p149 = scmp.ne.s32.totalorder %s137, %s138
      %p150 = scmp.eq.s32.totalorder %s48, 3
      %p151 = por %p149, %p150
      %p153 = scmp.ne.s32.totalorder %s138, %s152
      %p154 = scmp.eq.s32.totalorder %s48, 0
      %p155 = por %p153, %p154
      %s156 = ssub.s32 %s50, %s57
      %p157 = scmp.eq.s32.totalorder %s156, 0
      %s159 = sadd.s32 %s158, 1
      %s160 = scalar_select %p157, %s158, %s159
      %p163 = pneg %p157
      %p164 = scmp.eq.s32.totalorder %s42, 3
      %p165 = por %p163, %p164
      %p166 = scmp.ne.s32.totalorder %s158, %s161
      %p167 = scmp.eq.s32.totalorder %s42, 0
      %p168 = por %p166, %p167
      %p169 = scmp.ne.s32.totalorder %s158, %s161
      %p170 = scmp.eq.s32.totalorder %s47, 3
      %p171 = por %p169, %p170
      %p172 = scmp.ne.s32.totalorder %s161, %s162
      %p173 = scmp.eq.s32.totalorder %s47, 0
      %p174 = por %p172, %p173
      %p175 = scmp.ne.s32.totalorder %s161, %s162
      %p176 = scmp.eq.s32.totalorder %s48, 3
      %p177 = por %p175, %p176
      %p179 = scmp.ne.s32.totalorder %s162, %s178
      %p180 = scmp.eq.s32.totalorder %s48, 0
      %p181 = por %p179, %p180
      %s182 = ssub.s32 %s50, %s57
      %p183 = scmp.eq.s32.totalorder %s182, 0
      %s185 = sadd.s32 %s184, 1
      %s186 = scalar_select %p183, %s184, %s185
      %p189 = pneg %p183
      %p190 = scmp.eq.s32.totalorder %s42, 3
      %p191 = por %p189, %p190
      %p192 = scmp.ne.s32.totalorder %s184, %s187
      %p193 = scmp.eq.s32.totalorder %s42, 0
      %p194 = por %p192, %p193
      %p195 = scmp.ne.s32.totalorder %s184, %s187
      %p196 = scmp.eq.s32.totalorder %s47, 3
      %p197 = por %p195, %p196
      %p198 = scmp.ne.s32.totalorder %s187, %s188
      %p199 = scmp.eq.s32.totalorder %s47, 0
      %p200 = por %p198, %p199
      %p201 = scmp.ne.s32.totalorder %s187, %s188
      %p202 = scmp.eq.s32.totalorder %s48, 3
      %p203 = por %p201, %p202
      %p205 = scmp.ne.s32.totalorder %s188, %s204
      %p206 = scmp.eq.s32.totalorder %s48, 0
      %p207 = por %p205, %p206
      %s208 = ssub.s32 %s50, %s57
      %p209 = scmp.eq.s32.totalorder %s208, 0
      %s211 = sadd.s32 %s210, 1
      %s212 = scalar_select %p209, %s210, %s211
      %p215 = pneg %p209
      %p216 = scmp.eq.s32.totalorder %s42, 3
      %p217 = por %p215, %p216
      %p218 = scmp.ne.s32.totalorder %s210, %s213
      %p219 = scmp.eq.s32.totalorder %s42, 0
      %p220 = por %p218, %p219
      %p221 = scmp.ne.s32.totalorder %s210, %s213
      %p222 = scmp.eq.s32.totalorder %s47, 3
      %p223 = por %p221, %p222
      %p224 = scmp.ne.s32.totalorder %s213, %s214
      %p225 = scmp.eq.s32.totalorder %s47, 0
      %p226 = por %p224, %p225
      %p227 = scmp.ne.s32.totalorder %s213, %s214
      %p228 = scmp.eq.s32.totalorder %s48, 3
      %p229 = por %p227, %p228
      %p231 = scmp.ne.s32.totalorder %s214, %s230
      %p232 = scmp.eq.s32.totalorder %s48, 0
      %p233 = por %p231, %p232
      %s234 = ssub.s32 %s50, %s57
      %p235 = scmp.eq.s32.totalorder %s234, 0
      %s237 = sadd.s32 %s236, 1
      %s238 = scalar_select %p235, %s236, %s237
      %p241 = pneg %p235
      %p242 = scmp.eq.s32.totalorder %s42, 3
      %p243 = por %p241, %p242
      %p244 = scmp.ne.s32.totalorder %s236, %s239
      %p245 = scmp.eq.s32.totalorder %s42, 0
      %p246 = por %p244, %p245
      %p247 = scmp.ne.s32.totalorder %s236, %s239
      %p248 = scmp.eq.s32.totalorder %s47, 3
      %p249 = por %p247, %p248
      %p250 = scmp.ne.s32.totalorder %s239, %s240
      %p251 = scmp.eq.s32.totalorder %s47, 0
      %p252 = por %p250, %p251
      %p253 = scmp.ne.s32.totalorder %s239, %s240
      %p254 = scmp.eq.s32.totalorder %s48, 3
      %p255 = por %p253, %p254
      %p257 = scmp.ne.s32.totalorder %s240, %s256
      %p258 = scmp.eq.s32.totalorder %s48, 0
      %p259 = por %p257, %p258
      %s260 = ssub.s32 %s50, %s57
      %p261 = scmp.eq.s32.totalorder %s260, 0
      %s263 = sadd.s32 %s262, 1
      %s264 = scalar_select %p261, %s262, %s263
      %p267 = pneg %p261
      %p268 = scmp.eq.s32.totalorder %s42, 3
      %p269 = por %p267, %p268
      %p270 = scmp.ne.s32.totalorder %s262, %s265
      %p271 = scmp.eq.s32.totalorder %s42, 0
      %p272 = por %p270, %p271
      %p273 = scmp.ne.s32.totalorder %s262, %s265
      %p274 = scmp.eq.s32.totalorder %s47, 3
      %p275 = por %p273, %p274
      %p276 = scmp.ne.s32.totalorder %s265, %s266
      %p277 = scmp.eq.s32.totalorder %s47, 0
      %p278 = por %p276, %p277
      %p279 = scmp.ne.s32.totalorder %s265, %s266
      %p280 = scmp.eq.s32.totalorder %s48, 3
      %p281 = por %p279, %p280
      %p283 = scmp.ne.s32.totalorder %s266, %s282
      %p284 = scmp.eq.s32.totalorder %s48, 0
      %p285 = por %p283, %p284
      %s286 = ssub.s32 %s50, %s57
      %p287 = scmp.eq.s32.totalorder %s286, 0
      %s289 = sadd.s32 %s288, 1
      %s290 = scalar_select %p287, %s288, %s289
      %p293 = pneg %p287
      %p294 = scmp.eq.s32.totalorder %s42, 3
      %p295 = por %p293, %p294
      %p296 = scmp.ne.s32.totalorder %s288, %s291
      %p297 = scmp.eq.s32.totalorder %s42, 0
      %p298 = por %p296, %p297
      %p299 = scmp.ne.s32.totalorder %s288, %s291
      %p300 = scmp.eq.s32.totalorder %s47, 3
      %p301 = por %p299, %p300
      %p302 = scmp.ne.s32.totalorder %s291, %s292
      %p303 = scmp.eq.s32.totalorder %s47, 0
      %p304 = por %p302, %p303
      %p305 = scmp.ne.s32.totalorder %s291, %s292
      %p306 = scmp.eq.s32.totalorder %s48, 3
      %p307 = por %p305, %p306
      %p309 = scmp.ne.s32.totalorder %s292, %s308
      %p310 = scmp.eq.s32.totalorder %s48, 0
      %p311 = por %p309, %p310
      %s312 = ssub.s32 %s50, %s57
      %p313 = scmp.eq.s32.totalorder %s312, 0
      %s315 = sadd.s32 %s314, 1
      %s316 = scalar_select %p313, %s314, %s315
      %p319 = pneg %p313
      %p320 = scmp.eq.s32.totalorder %s42, 3
      %p321 = por %p319, %p320
      %p322 = scmp.ne.s32.totalorder %s314, %s317
      %p323 = scmp.eq.s32.totalorder %s42, 0
      %p324 = por %p322, %p323
      %p325 = scmp.ne.s32.totalorder %s314, %s317
      %p326 = scmp.eq.s32.totalorder %s47, 3
      %p327 = por %p325, %p326
      %p328 = scmp.ne.s32.totalorder %s317, %s318
      %p329 = scmp.eq.s32.totalorder %s47, 0
      %p330 = por %p328, %p329
      %p331 = scmp.ne.s32.totalorder %s317, %s318
      %p332 = scmp.eq.s32.totalorder %s48, 3
      %p333 = por %p331, %p332
      %p335 = scmp.ne.s32.totalorder %s318, %s334
      %p336 = scmp.eq.s32.totalorder %s48, 0
      %p337 = por %p335, %p336
      %s338 = ssub.s32 %s50, %s57
      %p339 = scmp.eq.s32.totalorder %s338, 0
      %s341 = sadd.s32 %s340, 1
      %s342 = scalar_select %p339, %s340, %s341
      %p345 = pneg %p339
      %p346 = scmp.eq.s32.totalorder %s42, 3
      %p347 = por %p345, %p346
      %p348 = scmp.ne.s32.totalorder %s340, %s343
      %p349 = scmp.eq.s32.totalorder %s42, 0
      %p350 = por %p348, %p349
      %p351 = scmp.ne.s32.totalorder %s340, %s343
      %p352 = scmp.eq.s32.totalorder %s47, 3
      %p353 = por %p351, %p352
      %p354 = scmp.ne.s32.totalorder %s343, %s344
      %p355 = scmp.eq.s32.totalorder %s47, 0
      %p356 = por %p354, %p355
      %p357 = scmp.ne.s32.totalorder %s343, %s344
      %p358 = scmp.eq.s32.totalorder %s48, 3
      %p359 = por %p357, %p358
      %p361 = scmp.ne.s32.totalorder %s344, %s360
      %p362 = scmp.eq.s32.totalorder %s48, 0
      %p363 = por %p361, %p362
      %s364 = ssub.s32 %s50, %s57
      %p365 = scmp.eq.s32.totalorder %s364, 0
      %s367 = sadd.s32 %s366, 1
      %s368 = scalar_select %p365, %s366, %s367
      %p371 = pneg %p365
      %p372 = scmp.eq.s32.totalorder %s42, 3
      %p373 = por %p371, %p372
      %p374 = scmp.ne.s32.totalorder %s366, %s369
      %p375 = scmp.eq.s32.totalorder %s42, 0
      %p376 = por %p374, %p375
      %p377 = scmp.ne.s32.totalorder %s366, %s369
      %p378 = scmp.eq.s32.totalorder %s47, 3
      %p379 = por %p377, %p378
      %p380 = scmp.ne.s32.totalorder %s369, %s370
      %p381 = scmp.eq.s32.totalorder %s47, 0
      %p382 = por %p380, %p381
      %p383 = scmp.ne.s32.totalorder %s369, %s370
      %p384 = scmp.eq.s32.totalorder %s48, 3
      %p385 = por %p383, %p384
      %p387 = scmp.ne.s32.totalorder %s370, %s386
      %p388 = scmp.eq.s32.totalorder %s48, 0
      %p389 = por %p387, %p388
      %s390 = ssub.s32 %s50, %s57
      %p391 = scmp.eq.s32.totalorder %s390, 0
      %s393 = sadd.s32 %s392, 1
      %s394 = scalar_select %p391, %s392, %s393
      %p397 = pneg %p391
      %p398 = scmp.eq.s32.totalorder %s42, 3
      %p399 = por %p397, %p398
      %p400 = scmp.ne.s32.totalorder %s392, %s395
      %p401 = scmp.eq.s32.totalorder %s42, 0
      %p402 = por %p400, %p401
      %p403 = scmp.ne.s32.totalorder %s392, %s395
      %p404 = scmp.eq.s32.totalorder %s47, 3
      %p405 = por %p403, %p404
      %p406 = scmp.ne.s32.totalorder %s395, %s396
      %p407 = scmp.eq.s32.totalorder %s47, 0
      %p408 = por %p406, %p407
      %p409 = scmp.ne.s32.totalorder %s395, %s396
      %p410 = scmp.eq.s32.totalorder %s48, 3
      %p411 = por %p409, %p410
      %p413 = scmp.ne.s32.totalorder %s396, %s412
      %p414 = scmp.eq.s32.totalorder %s48, 0
      %p415 = por %p413, %p414
      %s416 = ssub.s32 %s50, %s57
      %p417 = scmp.eq.s32.totalorder %s416, 0
      %s419 = sadd.s32 %s418, 1
      %s420 = scalar_select %p417, %s418, %s419
      %p423 = pneg %p417
      %p424 = scmp.eq.s32.totalorder %s42, 3
      %p425 = por %p423, %p424
      %p426 = scmp.ne.s32.totalorder %s418, %s421
      %p427 = scmp.eq.s32.totalorder %s42, 0
      %p428 = por %p426, %p427
      %p429 = scmp.ne.s32.totalorder %s418, %s421
      %p430 = scmp.eq.s32.totalorder %s47, 3
      %p431 = por %p429, %p430
      %p432 = scmp.ne.s32.totalorder %s421, %s422
      %p433 = scmp.eq.s32.totalorder %s47, 0
      %p434 = por %p432, %p433
      %p435 = scmp.ne.s32.totalorder %s421, %s422
      %p436 = scmp.eq.s32.totalorder %s48, 3
      %p437 = por %p435, %p436
      %p439 = scmp.ne.s32.totalorder %s422, %s438
      %p440 = scmp.eq.s32.totalorder %s48, 0
      %p441 = por %p439, %p440
      %s442 = ssub.s32 %s50, %s57
      %p443 = scmp.eq.s32.totalorder %s442, 0
      %s445 = sadd.s32 %s444, 1
      %s446 = scalar_select %p443, %s444, %s445
      %p449 = pneg %p443
      %p450 = scmp.eq.s32.totalorder %s42, 3
      %p451 = por %p449, %p450
      %p452 = scmp.ne.s32.totalorder %s444, %s447
      %p453 = scmp.eq.s32.totalorder %s42, 0
      %p454 = por %p452, %p453
      %p455 = scmp.ne.s32.totalorder %s444, %s447
      %p456 = scmp.eq.s32.totalorder %s47, 3
      %p457 = por %p455, %p456
      %p458 = scmp.ne.s32.totalorder %s447, %s448
      %p459 = scmp.eq.s32.totalorder %s47, 0
      %p460 = por %p458, %p459
      %p461 = scmp.ne.s32.totalorder %s447, %s448
      %p462 = scmp.eq.s32.totalorder %s48, 3
      %p463 = por %p461, %p462
      %p465 = scmp.ne.s32.totalorder %s448, %s464
      %p466 = scmp.eq.s32.totalorder %s48, 0
      %p467 = por %p465, %p466
      %s469 = sadd.s32 %s468, 1
      %p472 = scmp.eq.s32.totalorder %s42, 3
      %p473 = scmp.ne.s32.totalorder %s468, %s470
      %p474 = scmp.eq.s32.totalorder %s42, 0
      %p475 = por %p473, %p474
      %p476 = scmp.ne.s32.totalorder %s468, %s470
      %p477 = scmp.eq.s32.totalorder %s47, 3
      %p478 = por %p476, %p477
      %p479 = scmp.ne.s32.totalorder %s470, %s471
      %p480 = scmp.eq.s32.totalorder %s47, 0
      %p481 = por %p479, %p480
      %p482 = scmp.ne.s32.totalorder %s470, %s471
      %p483 = scmp.eq.s32.totalorder %s48, 3
      %p484 = por %p482, %p483
      %p486 = scmp.ne.s32.totalorder %s471, %s485
      %p487 = scmp.eq.s32.totalorder %s48, 0
      %p488 = por %p486, %p487
      %s490 = sadd.s32 %s489, 1
      %p493 = scmp.eq.s32.totalorder %s42, 3
      %p494 = scmp.ne.s32.totalorder %s489, %s491
      %p495 = scmp.eq.s32.totalorder %s42, 0
      %p496 = por %p494, %p495
      %p497 = scmp.ne.s32.totalorder %s489, %s491
      %p498 = scmp.eq.s32.totalorder %s47, 3
      %p499 = por %p497, %p498
      %p500 = scmp.ne.s32.totalorder %s491, %s492
      %p501 = scmp.eq.s32.totalorder %s47, 0
      %p502 = por %p500, %p501
      %p503 = scmp.ne.s32.totalorder %s491, %s492
      %p504 = scmp.eq.s32.totalorder %s48, 3
      %p505 = por %p503, %p504
      %p507 = scmp.ne.s32.totalorder %s492, %s506
      %p508 = scmp.eq.s32.totalorder %s48, 0
      %p509 = por %p507, %p508
      %s510 = ssub.s32 %s49, %s61
      %p511 = scmp.eq.s32.totalorder %s510, 0
      %s513 = sadd.s32 %s512, 1
      %s514 = scalar_select %p511, %s512, %s513
      %p517 = pneg %p511
      %p518 = scmp.eq.s32.totalorder %s42, 3
      %p519 = por %p517, %p518
      %p520 = scmp.ne.s32.totalorder %s512, %s515
      %p521 = scmp.eq.s32.totalorder %s42, 0
      %p522 = por %p520, %p521
      %p523 = scmp.ne.s32.totalorder %s512, %s515
      %p524 = scmp.eq.s32.totalorder %s47, 3
      %p525 = por %p523, %p524
      %p526 = scmp.ne.s32.totalorder %s515, %s516
      %p527 = scmp.eq.s32.totalorder %s47, 0
      %p528 = por %p526, %p527
      %p529 = scmp.ne.s32.totalorder %s515, %s516
      %p530 = scmp.eq.s32.totalorder %s48, 3
      %p531 = por %p529, %p530
      %p533 = scmp.ne.s32.totalorder %s516, %s532
      %p534 = scmp.eq.s32.totalorder %s48, 0
      %p535 = por %p533, %p534
      %s536 = ssub.s32 %s49, %s61
      %p537 = scmp.eq.s32.totalorder %s536, 0
      %s539 = sadd.s32 %s538, 1
      %s540 = scalar_select %p537, %s538, %s539
      %p543 = pneg %p537
      %p544 = scmp.eq.s32.totalorder %s42, 3
      %p545 = por %p543, %p544
      %p546 = scmp.ne.s32.totalorder %s538, %s541
      %p547 = scmp.eq.s32.totalorder %s42, 0
      %p548 = por %p546, %p547
      %p549 = scmp.ne.s32.totalorder %s538, %s541
      %p550 = scmp.eq.s32.totalorder %s47, 3
      %p551 = por %p549, %p550
      %p552 = scmp.ne.s32.totalorder %s541, %s542
      %p553 = scmp.eq.s32.totalorder %s47, 0
      %p554 = por %p552, %p553
      %p555 = scmp.ne.s32.totalorder %s541, %s542
      %p556 = scmp.eq.s32.totalorder %s48, 3
      %p557 = por %p555, %p556
      %p559 = scmp.ne.s32.totalorder %s542, %s558
      %p560 = scmp.eq.s32.totalorder %s48, 0
      %p561 = por %p559, %p560
      %p562 = scmp.le.s32.totalorder 1, %s42
      %p563 = scmp.lt.s32.totalorder %s42, 5
      %p564 = pnand %p562, %p563
      %p565 = pneg %p564
      // Predicated region
      $region9: #{tpu_custom_call.1} parent=5 // pred_check
        _
      $region10: #{tpu_custom_call.1} parent=5 // pred_check_branch
        %567 = sbr.rel (%p564) target = $region12
      $region11: #{tpu_custom_call.1} parent=5 // pred_region
        %s568 = ssub.s32 %s42, 1
        // Predicated region
        $region13: #{tpu_custom_call.1} parent=11 // pred_check
          %p569 = pneg %p127
        $region14: #{tpu_custom_call.1} parent=11 // pred_check_branch
          %571 = sbr.rel (%p569) target = $region16
        $region15: #{tpu_custom_call.1} parent=11 // pred_region
          %s573 = ssub.s32 16, 16
          %574 = vsyncadd [#allocation7], %s573
          %s576 = sshll.u32 [#allocation6], 4
          %s577 = int_to_ptr.vmem [resolvable:$true] %s576
          %579 = dma.hbm_to_vmem [thread:$0]  %s4, 16, %s577, [#allocation7]
        $region16: #{tpu_custom_call.1} parent=11 // pred_fallthru
          _
        // Predicated region
        $region17: #{tpu_custom_call.1} parent=11 // pred_check
          %p580 = pneg %p148
        $region18: #{tpu_custom_call.1} parent=11 // pred_check_branch
          %582 = sbr.rel (%p580) target = $region20
        $region19: #{tpu_custom_call.1} parent=11 // pred_region
          %s584 = ssub.s32 16, 16
          %585 = vsyncadd [#allocation10], %s584
          %s587 = sshll.u32 [#allocation9], 4
          %s588 = int_to_ptr.vmem [resolvable:$true] %s587
          %590 = dma.hbm_to_vmem [thread:$0]  %s5, 16, %s588, [#allocation10]
        $region20: #{tpu_custom_call.1} parent=11 // pred_fallthru
          _
        // Predicated region
        $region21: #{tpu_custom_call.1} parent=11 // pred_check
          %p591 = pneg %p481
        $region22: #{tpu_custom_call.1} parent=11 // pred_check_branch
          %593 = sbr.rel (%p591) target = $region24
        $region23: #{tpu_custom_call.1} parent=11 // pred_region
          _
        $region24: #{tpu_custom_call.1} parent=11 // pred_fallthru
          _
        // Predicated region
        $region25: #{tpu_custom_call.1} parent=11 // pred_check
          %p594 = pneg %p502
        $region26: #{tpu_custom_call.1} parent=11 // pred_check_branch
          %596 = sbr.rel (%p594) target = $region28
        $region27: #{tpu_custom_call.1} parent=11 // pred_region
          _
        $region28: #{tpu_custom_call.1} parent=11 // pred_fallthru
          _
      $region12: #{tpu_custom_call.1} parent=5 // pred_fallthru
        _
      %p597 = scmp.lt.s32.totalorder %s42, 4
      // Predicated region
      $region29: #{tpu_custom_call.1} parent=5 // pred_check
        %p598 = pneg %p597
      $region30: #{tpu_custom_call.1} parent=5 // pred_check_branch
        %600 = sbr.rel (%p598) target = $region32
      $region31: #{tpu_custom_call.1} parent=5 // pred_region
        // Predicated region
        $region33: #{tpu_custom_call.1} parent=31 // pred_check
          %p601 = pneg %p74
        $region34: #{tpu_custom_call.1} parent=31 // pred_check_branch
          %603 = sbr.rel (%p601) target = $region36
        $region35: #{tpu_custom_call.1} parent=31 // pred_region
          %p604 = scmp.lt.s32.totalorder %s49, 1
          %s605 = scalar_select %p604, %s49, 1
          %s606 = smul.addr %s605, 2
          %s607 = smul.addr %s606, 8
          %s608 = scalar_lea.vmem %s2, %s607
        $region36: #{tpu_custom_call.1} parent=31 // pred_fallthru
          _
        // Predicated region
        $region37: #{tpu_custom_call.1} parent=31 // pred_check
          %p609 = pneg %p100
        $region38: #{tpu_custom_call.1} parent=31 // pred_check_branch
          %611 = sbr.rel (%p609) target = $region40
        $region39: #{tpu_custom_call.1} parent=31 // pred_region
          %p612 = scmp.lt.s32.totalorder %s49, 1
          %s613 = scalar_select %p612, %s49, 1
          %s614 = scalar_lea.vmem %s3, %s613
        $region40: #{tpu_custom_call.1} parent=31 // pred_fallthru
          _
        // Predicated region
        $region41: #{tpu_custom_call.1} parent=31 // pred_check
          %p615 = pneg %p168
        $region42: #{tpu_custom_call.1} parent=31 // pred_check_branch
          %617 = sbr.rel (%p615) target = $region44
        $region43: #{tpu_custom_call.1} parent=31 // pred_region
          %p618 = scmp.lt.s32.totalorder %s50, 1
          %s619 = scalar_select %p618, %s50, 1
          %s620 = smul.addr %s619, 4
          %s621 = smul.addr %s620, 4
          %s622 = scalar_lea.vmem %s6, %s621
        $region44: #{tpu_custom_call.1} parent=31 // pred_fallthru
          _
        // Predicated region
        $region45: #{tpu_custom_call.1} parent=31 // pred_check
          %p623 = pneg %p194
        $region46: #{tpu_custom_call.1} parent=31 // pred_check_branch
          %625 = sbr.rel (%p623) target = $region48
        $region47: #{tpu_custom_call.1} parent=31 // pred_region
          %p626 = scmp.lt.s32.totalorder %s50, 1
          %s627 = scalar_select %p626, %s50, 1
          %s628 = scalar_lea.vmem %s7, %s627
        $region48: #{tpu_custom_call.1} parent=31 // pred_fallthru
          _
        // Predicated region
        $region49: #{tpu_custom_call.1} parent=31 // pred_check
          %p629 = pneg %p220
        $region50: #{tpu_custom_call.1} parent=31 // pred_check_branch
          %631 = sbr.rel (%p629) target = $region52
        $region51: #{tpu_custom_call.1} parent=31 // pred_region
          %p632 = scmp.lt.s32.totalorder %s50, 1
          %s633 = scalar_select %p632, %s50, 1
          %s634 = smul.addr %s633, 4
          %s635 = smul.addr %s634, 4
          %s636 = scalar_lea.vmem %s8, %s635
        $region52: #{tpu_custom_call.1} parent=31 // pred_fallthru
          _
        // Predicated region
        $region53: #{tpu_custom_call.1} parent=31 // pred_check
          %p637 = pneg %p246
        $region54: #{tpu_custom_call.1} parent=31 // pred_check_branch
          %639 = sbr.rel (%p637) target = $region56
        $region55: #{tpu_custom_call.1} parent=31 // pred_region
          %p640 = scmp.lt.s32.totalorder %s50, 1
          %s641 = scalar_select %p640, %s50, 1
          %s642 = scalar_lea.vmem %s9, %s641
        $region56: #{tpu_custom_call.1} parent=31 // pred_fallthru
          _
        // Predicated region
        $region57: #{tpu_custom_call.1} parent=31 // pred_check
          %p643 = pneg %p272
        $region58: #{tpu_custom_call.1} parent=31 // pred_check_branch
          %645 = sbr.rel (%p643) target = $region60
        $region59: #{tpu_custom_call.1} parent=31 // pred_region
          %p646 = scmp.lt.s32.totalorder %s50, 1
          %s647 = scalar_select %p646, %s50, 1
          %s648 = scalar_lea.vmem %s10, %s647
        $region60: #{tpu_custom_call.1} parent=31 // pred_fallthru
          _
        // Predicated region
        $region61: #{tpu_custom_call.1} parent=31 // pred_check
          %p649 = pneg %p298
        $region62: #{tpu_custom_call.1} parent=31 // pred_check_branch
          %651 = sbr.rel (%p649) target = $region64
        $region63: #{tpu_custom_call.1} parent=31 // pred_region
          %p652 = scmp.lt.s32.totalorder %s50, 1
          %s653 = scalar_select %p652, %s50, 1
          %s654 = scalar_lea.vmem %s11, %s653
        $region64: #{tpu_custom_call.1} parent=31 // pred_fallthru
          _
        // Predicated region
        $region65: #{tpu_custom_call.1} parent=31 // pred_check
          %p655 = pneg %p324
        $region66: #{tpu_custom_call.1} parent=31 // pred_check_branch
          %657 = sbr.rel (%p655) target = $region68
        $region67: #{tpu_custom_call.1} parent=31 // pred_region
          %s658 = sand.u32 %s42, 1
          %s659 = scalar_lea.sflag [#allocation7], %s658
          %s660 = sand.u32 %s314, 1
          %s661 = smul.addr %s660, 16
          %s662 = scalar_lea.vmem [#allocation11], %s661
          %s664 = ssub.s32 256, 256
          %665 = vsyncadd %s659, %s664
          %s666 = smul.addr %s50, 4
          %s667 = smul.addr %s666, 64
          %s668 = scalar_lea.hbm %s12, %s667
          %s669 = sshll.u32 %s662, 4
          %s670 = int_to_ptr.vmem [resolvable:$true] %s669
          %675 = dma.hbm_to_vmem [thread:$0]  %s668, 256, %s670, %s659, 64, 64, 4
        $region68: #{tpu_custom_call.1} parent=31 // pred_fallthru
          _
        // Predicated region
        $region69: #{tpu_custom_call.1} parent=31 // pred_check
          %p676 = pneg %p350
        $region70: #{tpu_custom_call.1} parent=31 // pred_check_branch
          %678 = sbr.rel (%p676) target = $region72
        $region71: #{tpu_custom_call.1} parent=31 // pred_region
          %p679 = scmp.lt.s32.totalorder %s50, 1
          %s680 = scalar_select %p679, %s50, 1
          %s681 = scalar_lea.vmem %s13, %s680
        $region72: #{tpu_custom_call.1} parent=31 // pred_fallthru
          _
        // Predicated region
        $region73: #{tpu_custom_call.1} parent=31 // pred_check
          %p682 = pneg %p376
        $region74: #{tpu_custom_call.1} parent=31 // pred_check_branch
          %684 = sbr.rel (%p682) target = $region76
        $region75: #{tpu_custom_call.1} parent=31 // pred_region
          %p685 = scmp.lt.s32.totalorder %s50, 1
          %s686 = scalar_select %p685, %s50, 1
          %s687 = smul.addr %s686, 8
          %s688 = smul.addr %s687, 4
          %s689 = scalar_lea.vmem %s14, %s688
        $region76: #{tpu_custom_call.1} parent=31 // pred_fallthru
          _
        // Predicated region
        $region77: #{tpu_custom_call.1} parent=31 // pred_check
          %p690 = pneg %p402
        $region78: #{tpu_custom_call.1} parent=31 // pred_check_branch
          %692 = sbr.rel (%p690) target = $region80
        $region79: #{tpu_custom_call.1} parent=31 // pred_region
          %p693 = scmp.lt.s32.totalorder %s50, 1
          %s694 = scalar_select %p693, %s50, 1
          %s695 = scalar_lea.vmem %s15, %s694
        $region80: #{tpu_custom_call.1} parent=31 // pred_fallthru
          _
        // Predicated region
        $region81: #{tpu_custom_call.1} parent=31 // pred_check
          %p696 = pneg %p428
        $region82: #{tpu_custom_call.1} parent=31 // pred_check_branch
          %698 = sbr.rel (%p696) target = $region84
        $region83: #{tpu_custom_call.1} parent=31 // pred_region
          %p699 = scmp.lt.s32.totalorder %s50, 1
          %s700 = scalar_select %p699, %s50, 1
          %s701 = scalar_lea.vmem %s16, %s700
        $region84: #{tpu_custom_call.1} parent=31 // pred_fallthru
          _
        // Predicated region
        $region85: #{tpu_custom_call.1} parent=31 // pred_check
          %p702 = pneg %p454
        $region86: #{tpu_custom_call.1} parent=31 // pred_check_branch
          %704 = sbr.rel (%p702) target = $region88
        $region87: #{tpu_custom_call.1} parent=31 // pred_region
          %p705 = scmp.lt.s32.totalorder %s50, 1
          %s706 = scalar_select %p705, %s50, 1
          %s707 = scalar_lea.vmem %s17, %s706
        $region88: #{tpu_custom_call.1} parent=31 // pred_fallthru
          _
      $region32: #{tpu_custom_call.1} parent=5 // pred_fallthru
        _
      %p708 = scmp.le.s32.totalorder 1, %s42
      %p709 = scmp.lt.s32.totalorder %s42, 5
      %p710 = pnand %p708, %p709
      %p711 = pneg %p710
      // Predicated region
      $region89: #{tpu_custom_call.1} parent=5 // pred_check
        _
      $region90: #{tpu_custom_call.1} parent=5 // pred_check_branch
        %713 = sbr.rel (%p710) target = $region92
      $region91: #{tpu_custom_call.1} parent=5 // pred_region
        %s714 = ssub.s32 %s42, 1
        // Predicated region
        $region93: #{tpu_custom_call.1} parent=91 // pred_check
          %p715 = pneg %p127
        $region94: #{tpu_custom_call.1} parent=91 // pred_check_branch
          %717 = sbr.rel (%p715) target = $region96
        $region95: #{tpu_custom_call.1} parent=91 // pred_region
          %718 = dma.done [#allocation7], 16
        $region96: #{tpu_custom_call.1} parent=91 // pred_fallthru
          _
        // Predicated region
        $region97: #{tpu_custom_call.1} parent=91 // pred_check
          %p719 = pneg %p148
        $region98: #{tpu_custom_call.1} parent=91 // pred_check_branch
          %721 = sbr.rel (%p719) target = $region100
        $region99: #{tpu_custom_call.1} parent=91 // pred_region
          %722 = dma.done [#allocation10], 16
        $region100: #{tpu_custom_call.1} parent=91 // pred_fallthru
          _
        %s723 = sand.u32 %s47, 1
        %s724 = scalar_lea.sflag [#allocation7], %s723
        %s725 = sand.u32 %s317, 1
        %s726 = smul.addr %s725, 16
        %s727 = scalar_lea.vmem [#allocation11], %s726
        // Predicated region
        $region101: #{tpu_custom_call.1} parent=91 // pred_check
          %p728 = pneg %p330
        $region102: #{tpu_custom_call.1} parent=91 // pred_check_branch
          %730 = sbr.rel (%p728) target = $region104
        $region103: #{tpu_custom_call.1} parent=91 // pred_region
          %731 = dma.done %s724, 256
        $region104: #{tpu_custom_call.1} parent=91 // pred_fallthru
          _
        %p732 = scmp.lt.s32.totalorder %s51, 1
        %s733 = scalar_select %p732, %s51, 1
        %s734 = smul.addr %s733, 2
        %s735 = smul.addr %s734, 8
        %s736 = scalar_lea.vmem %s2, %s735
        %p737 = pneg %p80
        %p738 = pneg %p77
        %p739 = scmp.lt.s32.totalorder %s51, 1
        %s740 = scalar_select %p739, %s51, 1
        %s741 = scalar_lea.vmem %s3, %s740
        %p742 = pneg %p106
        %p743 = pneg %p103
        %p744 = pneg %p127
        %p745 = pneg %p124
        %p746 = pneg %p148
        %p747 = pneg %p145
        %p748 = scmp.lt.s32.totalorder %s52, 1
        %s749 = scalar_select %p748, %s52, 1
        %s750 = smul.addr %s749, 4
        %s751 = smul.addr %s750, 4
        %s752 = scalar_lea.vmem %s6, %s751
        %p753 = pneg %p174
        %p754 = pneg %p171
        %p755 = scmp.lt.s32.totalorder %s52, 1
        %s756 = scalar_select %p755, %s52, 1
        %s757 = scalar_lea.vmem %s7, %s756
        %p758 = pneg %p200
        %p759 = pneg %p197
        %p760 = scmp.lt.s32.totalorder %s52, 1
        %s761 = scalar_select %p760, %s52, 1
        %s762 = smul.addr %s761, 4
        %s763 = smul.addr %s762, 4
        %s764 = scalar_lea.vmem %s8, %s763
        %p765 = pneg %p226
        %p766 = pneg %p223
        %p767 = scmp.lt.s32.totalorder %s52, 1
        %s768 = scalar_select %p767, %s52, 1
        %s769 = scalar_lea.vmem %s9, %s768
        %p770 = pneg %p252
        %p771 = pneg %p249
        %p772 = scmp.lt.s32.totalorder %s52, 1
        %s773 = scalar_select %p772, %s52, 1
        %s774 = scalar_lea.vmem %s10, %s773
        %p775 = pneg %p278
        %p776 = pneg %p275
        %p777 = scmp.lt.s32.totalorder %s52, 1
        %s778 = scalar_select %p777, %s52, 1
        %s779 = scalar_lea.vmem %s11, %s778
        %p780 = pneg %p304
        %p781 = pneg %p301
        %s782 = sand.u32 %s47, 1
        %s783 = scalar_lea.sflag [#allocation7], %s782
        %s784 = sand.u32 %s317, 1
        %s785 = smul.addr %s784, 16
        %s786 = scalar_lea.vmem [#allocation11], %s785
        %p787 = pneg %p330
        %p788 = pneg %p327
        %p789 = scmp.lt.s32.totalorder %s52, 1
        %s790 = scalar_select %p789, %s52, 1
        %s791 = scalar_lea.vmem %s13, %s790
        %p792 = pneg %p356
        %p793 = pneg %p353
        %p794 = scmp.lt.s32.totalorder %s52, 1
        %s795 = scalar_select %p794, %s52, 1
        %s796 = smul.addr %s795, 8
        %s797 = smul.addr %s796, 4
        %s798 = scalar_lea.vmem %s14, %s797
        %p799 = pneg %p382
        %p800 = pneg %p379
        %p801 = scmp.lt.s32.totalorder %s52, 1
        %s802 = scalar_select %p801, %s52, 1
        %s803 = scalar_lea.vmem %s15, %s802
        %p804 = pneg %p408
        %p805 = pneg %p405
        %p806 = scmp.lt.s32.totalorder %s52, 1
        %s807 = scalar_select %p806, %s52, 1
        %s808 = scalar_lea.vmem %s16, %s807
        %p809 = pneg %p434
        %p810 = pneg %p431
        %p811 = scmp.lt.s32.totalorder %s52, 1
        %s812 = scalar_select %p811, %s52, 1
        %s813 = scalar_lea.vmem %s17, %s812
        %p814 = pneg %p460
        %p815 = pneg %p457
        %p816 = pneg %p481
        %p817 = pneg %p478
        %p818 = pneg %p502
        %p819 = pneg %p499
        %p820 = pneg %p528
        %p821 = pneg %p525
        %s822 = sand.u32 %s515, 1
        %s823 = scalar_lea.sflag [#allocation8], %s822
        %s824 = sand.u32 %s515, 1
        %s825 = smul.addr %s824, 2
        %s826 = scalar_lea.vmem [#allocation12], %s825
        %p827 = pneg %p554
        %p828 = pneg %p551
        %s829 = sand.u32 %s541, 1
        %s830 = scalar_lea.sflag [#allocation14], %s829
        %s831 = sand.u32 %s541, 1
        %s832 = scalar_lea.vmem [#allocation13], %s831
        %p833 = scmp.lt.s32.totalorder %s51, 1
        %s834 = scalar_select %p833, %s51, 1
        %s835 = smul.addr %s834, 2
        %s836 = smul.addr %s835, 8
        %s837 = scalar_lea.vmem %s2, %s836
        %p838 = scmp.lt.s32.totalorder %s51, 1
        %s839 = scalar_select %p838, %s51, 1
        %s840 = scalar_lea.vmem %s3, %s839
        %p841 = scmp.lt.s32.totalorder %s52, 1
        %s842 = scalar_select %p841, %s52, 1
        %s843 = smul.addr %s842, 4
        %s844 = smul.addr %s843, 4
        %s845 = scalar_lea.vmem %s6, %s844
        %p846 = scmp.lt.s32.totalorder %s52, 1
        %s847 = scalar_select %p846, %s52, 1
        %s848 = scalar_lea.vmem %s7, %s847
        %p849 = scmp.lt.s32.totalorder %s52, 1
        %s850 = scalar_select %p849, %s52, 1
        %s851 = smul.addr %s850, 4
        %s852 = smul.addr %s851, 4
        %s853 = scalar_lea.vmem %s8, %s852
        %p854 = scmp.lt.s32.totalorder %s52, 1
        %s855 = scalar_select %p854, %s52, 1
        %s856 = scalar_lea.vmem %s9, %s855
        %p857 = scmp.lt.s32.totalorder %s52, 1
        %s858 = scalar_select %p857, %s52, 1
        %s859 = scalar_lea.vmem %s10, %s858
        %p860 = scmp.lt.s32.totalorder %s52, 1
        %s861 = scalar_select %p860, %s52, 1
        %s862 = scalar_lea.vmem %s11, %s861
        %p863 = scmp.lt.s32.totalorder %s52, 1
        %s864 = scalar_select %p863, %s52, 1
        %s865 = scalar_lea.vmem %s13, %s864
        %p866 = scmp.lt.s32.totalorder %s52, 1
        %s867 = scalar_select %p866, %s52, 1
        %s868 = smul.addr %s867, 8
        %s869 = smul.addr %s868, 4
        %s870 = scalar_lea.vmem %s14, %s869
        %p871 = scmp.lt.s32.totalorder %s52, 1
        %s872 = scalar_select %p871, %s52, 1
        %s873 = scalar_lea.vmem %s15, %s872
        %p874 = scmp.lt.s32.totalorder %s52, 1
        %s875 = scalar_select %p874, %s52, 1
        %s876 = scalar_lea.vmem %s16, %s875
        %p877 = scmp.lt.s32.totalorder %s52, 1
        %s878 = scalar_select %p877, %s52, 1
        %s879 = scalar_lea.vmem %s17, %s878
        %p881 = scmp.eq.s32.totalorder %s52, 0
        // Predicated region
        $region105: #{tpu_custom_call.1} parent=91 // pred_check
          %p882 = pneg %p881
        $region106: #{tpu_custom_call.1} parent=91 // pred_check_branch
          %884 = sbr.rel (%p882) target = $region108
        $region107: #{tpu_custom_call.1} parent=91 // pred_region
          %v885 = vld [vmem:[%s837] sm:$0xff]
          %v886 = vld [vmem:[%s837 + $0x8] sm:$0xff]
          %v887 = vld [vmem:[#allocation6] sm:$0x1]
          %v888 = vld [vmem:[#allocation9] sm:$0x1]
          %vm889 = vcmask 261120
          %v890 = vsel %vm889, %v885, 0.0
          %891 = vadd.xlane.f32.xlu0 %v890
          %v892 = vpop.xlane.xlu0 %891
          %v893 = vsel %vm889, %v886, 0.0
          %894 = vadd.xlane.f32.xlu0 %v893
          %v895 = vpop.xlane.xlu0 %894
          %v896 = vrcp.pop 32.0
          %v897 = vmul.f32 %v892, %v896
          %v898 = vmul.f32 %v895, %v896
          %v899 = vsub.f32 %v885, %v897
          %v900 = vsub.f32 %v886, %v898
          %v901 = vmul.f32 %v899, %v899
          %v902 = vmul.f32 %v900, %v900
          %v903 = vsel %vm889, %v901, 0.0
          %904 = vadd.xlane.f32.xlu0 %v903
          %v905 = vpop.xlane.xlu0 %904
          %v906 = vsel %vm889, %v902, 0.0
          %907 = vadd.xlane.f32.xlu0 %v906
          %v908 = vpop.xlane.xlu0 %907
          %v909 = vmul.f32 %v905, %v896
          %v910 = vmul.f32 %v908, %v896
          %v911 = vadd.f32 %v909, 1e-12
          %v912 = vadd.f32 %v910, 1e-12
          %v913 = vrsqrt.pop %v911
          %v914 = vrsqrt.pop %v912
          %v915 = vmul.f32 %v899, %v913
          %v916 = vmul.f32 %v900, %v914
          %v918 = vlaneseq
          %v919 = vshrl.u32 %v918, 7
          %v920 = vsub.s32 0, %v919
          %v921 = vrot.slane %v887, %v920
          %v923 = vmul.f32 %v915, %v921
          %v924 = vmul.f32 %v916, %v921
          %v926 = vlaneseq
          %v927 = vshrl.u32 %v926, 7
          %v928 = vsub.s32 0, %v927
          %v929 = vrot.slane %v888, %v928
          %v931 = vadd.f32 %v923, %v929
          %v932 = vadd.f32 %v924, %v929
          %933 = vst.msk [vmem:[#allocation2] sm:$0xff] %vm889, %v931
          %934 = vst.msk [vmem:[#allocation2 + $0x8] sm:$0xff] %vm889, %v932
        $region108: #{tpu_custom_call.1} parent=91 // pred_fallthru
          _
        %v935 = vld [vmem:[#allocation2] sm:$0xff]
        %v936 = vld [vmem:[#allocation2 + $0x8] sm:$0xff]
        %v937 = vld [vmem:[%s840] sm:$0x1]
        %v938 = vld [vmem:[%s845] sm:$0xf]
        %v939 = vld [vmem:[%s845 + $0x4] sm:$0xf]
        %v940 = vld [vmem:[%s845 + $0x8] sm:$0xf]
        %v941 = vld [vmem:[%s845 + $0xc] sm:$0xf]
        %v942 = vld [vmem:[%s848] sm:$0x1]
        %v943 = vld [vmem:[%s853] sm:$0xf]
        %v944 = vld [vmem:[%s853 + $0x4] sm:$0xf]
        %v945 = vld [vmem:[%s853 + $0x8] sm:$0xf]
        %v946 = vld [vmem:[%s853 + $0xc] sm:$0xf]
        %v947 = vld [vmem:[%s856] sm:$0x1]
        %v948 = vld [vmem:[%s859] sm:$0x1]
        %v949 = vld [vmem:[%s862] sm:$0x1]
        %v950 = vld [vmem:[%s727] sm:$0xf]
        %v951 = vld [vmem:[%s727 + $0x4] sm:$0xf]
        %v952 = vld [vmem:[%s727 + $0x8] sm:$0xf]
        %v953 = vld [vmem:[%s727 + $0xc] sm:$0xf]
        %v954 = vld [vmem:[%s865] sm:$0x1]
        %v955 = vld [vmem:[%s870] sm:$0xf]
        %v956 = vld [vmem:[%s870 + $0x4] sm:$0xf]
        %v957 = vld [vmem:[%s870 + $0x8] sm:$0xf]
        %v958 = vld [vmem:[%s870 + $0xc] sm:$0xf]
        %v959 = vld [vmem:[%s870 + $0x10] sm:$0xf]
        %v960 = vld [vmem:[%s870 + $0x14] sm:$0xf]
        %v961 = vld [vmem:[%s870 + $0x18] sm:$0xf]
        %v962 = vld [vmem:[%s870 + $0x1c] sm:$0xf]
        %v963 = vld [vmem:[%s873] sm:$0x1]
        %v964 = vld [vmem:[%s876] sm:$0x1]
        %v965 = vld [vmem:[%s879] sm:$0x1]
        %v966 = vpack.c.bf16 %v936, %v935
        %v968 = vlaneseq
        %v969 = vshrl.u32 %v968, 7
        %v970 = vsub.s32 0, %v969
        %v971 = vrot.slane %v942, %v970
        %v977 = vunpack.c.l.b16 %v938
        %v978 = vunpack.c.l.b16 %v939
        %v979 = vunpack.c.l.b16 %v940
        %v980 = vunpack.c.l.b16 %v941
        %v981 = vpack.c.b16 %v978, %v977
        %v982 = vpack.c.b16 %v980, %v979
        %vm985 = vcmask 261120
        %v987 = vsel %vm985, %v966, 0
        %989 = vmatprep.subr.bf16.mxu0 0
        %990 = vmatpush1.bf16.msra.mxu0 0
        %991 = vmatprep.subr.bf16.mxu0 0
        %992 = vmatpush1.bf16.msra.mxu0 0
        %993 = vmatprep.subr.bf16.mxu0 0
        %994 = vmatpush1.bf16.msra.mxu0 0
        %995 = vmatprep.subr.bf16.mxu0 0
        %996 = vmatpush1.bf16.msra.mxu0 0
        %997 = vmatprep.subr.bf16.mxu0 0
        %998 = vmatpush1.bf16.msra.mxu0 0
        %999 = vmatprep.subr.bf16.mxu0 0
        %1000 = vmatpush1.bf16.msra.mxu0 0
        %1001 = vmatprep.subr.bf16.mxu0 0
        %1002 = vmatpush1.bf16.msra.mxu0 %v982
        %1003 = vmatprep.subr.bf16.mxu0 0
        %1004 = vmatpush1.bf16.msra.mxu0 %v981
        %1005 = vmatprep.subr.bf16.mxu0 0
        %1006 = vmatpush2.bf16.msra.mxu0 0
        %1007 = vmatprep.subr.bf16.mxu0 0
        %1008 = vmatpush2.bf16.msra.mxu0 0
        %1009 = vmatprep.subr.bf16.mxu0 0
        %1010 = vmatpush2.bf16.msra.mxu0 0
        %1011 = vmatprep.subr.bf16.mxu0 0
        %1012 = vmatpush2.bf16.msra.mxu0 0
        %1013 = vmatprep.subr.bf16.mxu0 0
        %1014 = vmatpush2.bf16.msra.mxu0 0
        %1015 = vmatprep.subr.bf16.mxu0 0
        %1016 = vmatpush2.bf16.msra.mxu0 0
        %1017 = vmatprep.subr.bf16.mxu0 0
        %1018 = vmatpush2.bf16.msra.mxu0 0
        %1019 = vmatprep.subr.bf16.mxu0 0
        %1020 = vmatpush2.bf16.msra.mxu0 0
        %1021 = vmatprep.mubr.bf16.mxu0 0
        %1022 = vmatmul.mubr.bf16.gmra.mxu0 %v987
        %v1023 = vpop.f32.mrf.mxu0
        %v1024 = vadd.f32 %v971, %v1023
        %v1025 = vpop.f32.mrf.mxu0
        %v1026 = vpop.f32.mrf.mxu0
        %v1027 = vadd.f32 %v971, %v1026
        %v1028 = vpop.f32.mrf.mxu0
        %1029 = vdwg.mxu0
        %v1030 = vpack.c.bf16 %v1027, %v1024
        %1032 = vrot.lane.b32.xlu0 %v1030, 96
        %v1033 = vpop.permute.xlu0 %1032
        %vm1034 = vcmask 130048
        %v1036 = vsel %vm1034, %v1030, 0
        %v1039 = vsel %vm1034, %v1033, 0
        %1041 = vmatprep.subr.bf16.mxu0 0
        %1042 = vmatpush1.bf16.xpose.msra.mxu0 0
        %1043 = vmatprep.subr.bf16.mxu0 0
        %1044 = vmatpush1.bf16.xpose.msra.mxu0 0
        %1045 = vmatprep.subr.bf16.mxu0 0
        %1046 = vmatpush1.bf16.xpose.msra.mxu0 0
        %1047 = vmatprep.subr.bf16.mxu0 0
        %1048 = vmatpush1.bf16.xpose.msra.mxu0 0
        %1049 = vmatprep.subr.bf16.mxu0 0
        %1050 = vmatpush1.bf16.xpose.msra.mxu0 0
        %1051 = vmatprep.subr.bf16.mxu0 0
        %1052 = vmatpush1.bf16.xpose.msra.mxu0 0
        %1053 = vmatprep.subr.bf16.mxu0 0
        %1054 = vmatpush1.bf16.xpose.msra.mxu0 0
        %1055 = vmatprep.subr.bf16.mxu0 0
        %1056 = vmatpush1.bf16.xpose.msra.mxu0 %v1039
        %1057 = vmatprep.subr.bf16.mxu0 0
        %1058 = vmatpush2.bf16.xpose.msra.mxu0 0
        %1059 = vmatprep.subr.bf16.mxu0 0
        %1060 = vmatpush2.bf16.xpose.msra.mxu0 0
        %1061 = vmatprep.subr.bf16.mxu0 0
        %1062 = vmatpush2.bf16.xpose.msra.mxu0 0
        %1063 = vmatprep.subr.bf16.mxu0 0
        %1064 = vmatpush2.bf16.xpose.msra.mxu0 0
        %1065 = vmatprep.subr.bf16.mxu0 0
        %1066 = vmatpush2.bf16.xpose.msra.mxu0 0
        %1067 = vmatprep.subr.bf16.mxu0 0
        %1068 = vmatpush2.bf16.xpose.msra.mxu0 0
        %1069 = vmatprep.subr.bf16.mxu0 0
        %1070 = vmatpush2.bf16.xpose.msra.mxu0 0
        %1071 = vmatprep.subr.bf16.mxu0 0
        %1072 = vmatpush2.bf16.xpose.msra.mxu0 0
        %1073 = vmatprep.mubr.bf16.mxu0 0
        %1074 = vmatmul.mubr.bf16.gmra.mxu0 %v1036
        %v1075 = vpop.f32.mrf.mxu0
        %v1076 = vadd.f32 0.0, %v1075
        %v1077 = vpop.f32.mrf.mxu0
        %v1078 = vpop.f32.mrf.mxu0
        %v1079 = vadd.f32 0.0, %v1078
        %v1080 = vpop.f32.mrf.mxu0
        %1081 = vdwg.mxu0
        %v1082 = vmul.f32 %v1076, 0.25
        %v1083 = vmul.f32 %v1079, 0.25
        %v1085 = vlaneseq
        %v1086 = vshrl.u32 %v1085, 7
        %v1087 = vsub.s32 0, %v1086
        %v1088 = vrot.slane %v937, %v1087
        %v1090 = vadd.f32 %v1082, %v1088
        %v1091 = vadd.f32 %v1083, %v1088
        %v1092 = vsel %vm1034, %v1090, -inf
        %1093 = vmax.xlane.f32.xlu0 %v1092
        %v1094 = vpop.xlane.xlu0 %1093
        %v1095 = vsel %vm1034, %v1091, -inf
        %1096 = vmax.xlane.f32.xlu0 %v1095
        %v1097 = vpop.xlane.xlu0 %1096
        %v1098 = vsub.f32 %v1090, %v1094
        %v1099 = vsub.f32 %v1091, %v1097
        %v1100 = vmul.f32 %v1098, 1.442695
        %v1101 = vpow.pop %v1100
        %v1102 = vmul.f32 %v1099, 1.442695
        %v1103 = vpow.pop %v1102
        %v1104 = vsel %vm1034, %v1101, 0.0
        %1105 = vadd.xlane.f32.xlu0 %v1104
        %v1106 = vpop.xlane.xlu0 %1105
        %v1107 = vsel %vm1034, %v1103, 0.0
        %1108 = vadd.xlane.f32.xlu0 %v1107
        %v1109 = vpop.xlane.xlu0 %1108
        %v1110 = vrcp.pop %v1106
        %v1111 = vrcp.pop %v1109
        %v1112 = vmul.f32 %v1101, %v1110
        %v1113 = vmul.f32 %v1103, %v1111
        %v1114 = vpack.c.bf16 %v1113, %v1112
        %1115 = vrot.lane.b32.xlu0 %v1030, 64
        %v1116 = vpop.permute.xlu0 %1115
        %v1119 = vsel %vm1034, %v1114, 0
        %1121 = vmatprep.subr.bf16.mxu0 0
        %1122 = vmatpush1.bf16.msra.mxu0 0
        %1123 = vmatprep.subr.bf16.mxu0 0
        %1124 = vmatpush1.bf16.msra.mxu0 0
        %1125 = vmatprep.subr.bf16.mxu0 0
        %1126 = vmatpush1.bf16.msra.mxu0 0
        %1127 = vmatprep.subr.bf16.mxu0 0
        %1128 = vmatpush1.bf16.msra.mxu0 0
        %1129 = vmatprep.subr.bf16.mxu0 0
        %1130 = vmatpush1.bf16.msra.mxu0 0
        %1131 = vmatprep.subr.bf16.mxu0 0
        %1132 = vmatpush1.bf16.msra.mxu0 0
        %1133 = vmatprep.subr.bf16.mxu0 0
        %1134 = vmatpush1.bf16.msra.mxu0 0
        %1135 = vmatprep.subr.bf16.mxu0 0
        %1136 = vmatpush1.bf16.msra.mxu0 %v1116
        %1137 = vmatprep.subr.bf16.mxu0 0
        %1138 = vmatpush2.bf16.msra.mxu0 0
        %1139 = vmatprep.subr.bf16.mxu0 0
        %1140 = vmatpush2.bf16.msra.mxu0 0
        %1141 = vmatprep.subr.bf16.mxu0 0
        %1142 = vmatpush2.bf16.msra.mxu0 0
        %1143 = vmatprep.subr.bf16.mxu0 0
        %1144 = vmatpush2.bf16.msra.mxu0 0
        %1145 = vmatprep.subr.bf16.mxu0 0
        %1146 = vmatpush2.bf16.msra.mxu0 0
        %1147 = vmatprep.subr.bf16.mxu0 0
        %1148 = vmatpush2.bf16.msra.mxu0 0
        %1149 = vmatprep.subr.bf16.mxu0 0
        %1150 = vmatpush2.bf16.msra.mxu0 0
        %1151 = vmatprep.subr.bf16.mxu0 0
        %1152 = vmatpush2.bf16.msra.mxu0 0
        %1153 = vmatprep.mubr.bf16.mxu0 0
        %1154 = vmatmul.mubr.bf16.gmra.mxu0 %v1119
        %v1155 = vpop.f32.mrf.mxu0
        %v1156 = vadd.f32 0.0, %v1155
        %v1157 = vpop.f32.mrf.mxu0
        %v1158 = vpop.f32.mrf.mxu0
        %v1159 = vadd.f32 0.0, %v1158
        %v1160 = vpop.f32.mrf.mxu0
        %1161 = vdwg.mxu0
        %1162 = vrot.lane.b32.xlu0 %v1030, 112
        %v1163 = vpop.permute.xlu0 %1162
        %1164 = vrot.lane.b32.xlu0 %v1030, 80
        %v1165 = vpop.permute.xlu0 %1164
        %v1167 = vsel %vm1034, %v1163, 0
        %v1170 = vsel %vm1034, %v1165, 0
        %1172 = vmatprep.subr.bf16.mxu0 0
        %1173 = vmatpush1.bf16.xpose.msra.mxu0 0
        %1174 = vmatprep.subr.bf16.mxu0 0
        %1175 = vmatpush1.bf16.xpose.msra.mxu0 0
        %1176 = vmatprep.subr.bf16.mxu0 0
        %1177 = vmatpush1.bf16.xpose.msra.mxu0 0
        %1178 = vmatprep.subr.bf16.mxu0 0
        %1179 = vmatpush1.bf16.xpose.msra.mxu0 0
        %1180 = vmatprep.subr.bf16.mxu0 0
        %1181 = vmatpush1.bf16.xpose.msra.mxu0 0
        %1182 = vmatprep.subr.bf16.mxu0 0
        %1183 = vmatpush1.bf16.xpose.msra.mxu0 0
        %1184 = vmatprep.subr.bf16.mxu0 0
        %1185 = vmatpush1.bf16.xpose.msra.mxu0 0
        %1186 = vmatprep.subr.bf16.mxu0 0
        %1187 = vmatpush1.bf16.xpose.msra.mxu0 %v1170
        %1188 = vmatprep.subr.bf16.mxu0 0
        %1189 = vmatpush2.bf16.xpose.msra.mxu0 0
        %1190 = vmatprep.subr.bf16.mxu0 0
        %1191 = vmatpush2.bf16.xpose.msra.mxu0 0
        %1192 = vmatprep.subr.bf16.mxu0 0
        %1193 = vmatpush2.bf16.xpose.msra.mxu0 0
        %1194 = vmatprep.subr.bf16.mxu0 0
        %1195 = vmatpush2.bf16.xpose.msra.mxu0 0
        %1196 = vmatprep.subr.bf16.mxu0 0
        %1197 = vmatpush2.bf16.xpose.msra.mxu0 0
        %1198 = vmatprep.subr.bf16.mxu0 0
        %1199 = vmatpush2.bf16.xpose.msra.mxu0 0
        %1200 = vmatprep.subr.bf16.mxu0 0
        %1201 = vmatpush2.bf16.xpose.msra.mxu0 0
        %1202 = vmatprep.subr.bf16.mxu0 0
        %1203 = vmatpush2.bf16.xpose.msra.mxu0 0
        %1204 = vmatprep.mubr.bf16.mxu0 0
        %1205 = vmatmul.mubr.bf16.gmra.mxu0 %v1167
        %v1206 = vpop.f32.mrf.mxu0
        %v1207 = vadd.f32 0.0, %v1206
        %v1208 = vpop.f32.mrf.mxu0
        %v1209 = vpop.f32.mrf.mxu0
        %v1210 = vadd.f32 0.0, %v1209
        %v1211 = vpop.f32.mrf.mxu0
        %1212 = vdwg.mxu0
        %v1213 = vmul.f32 %v1207, 0.25
        %v1214 = vmul.f32 %v1210, 0.25
        %v1215 = vadd.f32 %v1213, %v1088
        %v1216 = vadd.f32 %v1214, %v1088
        %v1217 = vsel %vm1034, %v1215, -inf
        %1218 = vmax.xlane.f32.xlu0 %v1217
        %v1219 = vpop.xlane.xlu0 %1218
        %v1220 = vsel %vm1034, %v1216, -inf
        %1221 = vmax.xlane.f32.xlu0 %v1220
        %v1222 = vpop.xlane.xlu0 %1221
        %v1223 = vsub.f32 %v1215, %v1219
        %v1224 = vsub.f32 %v1216, %v1222
        %v1225 = vmul.f32 %v1223, 1.442695
        %v1226 = vpow.pop %v1225
        %v1227 = vmul.f32 %v1224, 1.442695
        %v1228 = vpow.pop %v1227
        %v1229 = vsel %vm1034, %v1226, 0.0
        %1230 = vadd.xlane.f32.xlu0 %v1229
        %v1231 = vpop.xlane.xlu0 %1230
        %v1232 = vsel %vm1034, %v1228, 0.0
        %1233 = vadd.xlane.f32.xlu0 %v1232
        %v1234 = vpop.xlane.xlu0 %1233
        %v1235 = vrcp.pop %v1231
        %v1236 = vrcp.pop %v1234
        %v1237 = vmul.f32 %v1226, %v1235
        %v1238 = vmul.f32 %v1228, %v1236
        %v1239 = vpack.c.bf16 %v1238, %v1237
        %1240 = vrot.lane.b32.xlu0 %v1030, 48
        %v1241 = vpop.permute.xlu0 %1240
        %v1244 = vsel %vm1034, %v1239, 0
        %1246 = vmatprep.subr.bf16.mxu0 0
        %1247 = vmatpush1.bf16.msra.mxu0 0
        %1248 = vmatprep.subr.bf16.mxu0 0
        %1249 = vmatpush1.bf16.msra.mxu0 0
        %1250 = vmatprep.subr.bf16.mxu0 0
        %1251 = vmatpush1.bf16.msra.mxu0 0
        %1252 = vmatprep.subr.bf16.mxu0 0
        %1253 = vmatpush1.bf16.msra.mxu0 0
        %1254 = vmatprep.subr.bf16.mxu0 0
        %1255 = vmatpush1.bf16.msra.mxu0 0
        %1256 = vmatprep.subr.bf16.mxu0 0
        %1257 = vmatpush1.bf16.msra.mxu0 0
        %1258 = vmatprep.subr.bf16.mxu0 0
        %1259 = vmatpush1.bf16.msra.mxu0 0
        %1260 = vmatprep.subr.bf16.mxu0 0
        %1261 = vmatpush1.bf16.msra.mxu0 %v1241
        %1262 = vmatprep.subr.bf16.mxu0 0
        %1263 = vmatpush2.bf16.msra.mxu0 0
        %1264 = vmatprep.subr.bf16.mxu0 0
        %1265 = vmatpush2.bf16.msra.mxu0 0
        %1266 = vmatprep.subr.bf16.mxu0 0
        %1267 = vmatpush2.bf16.msra.mxu0 0
        %1268 = vmatprep.subr.bf16.mxu0 0
        %1269 = vmatpush2.bf16.msra.mxu0 0
        %1270 = vmatprep.subr.bf16.mxu0 0
        %1271 = vmatpush2.bf16.msra.mxu0 0
        %1272 = vmatprep.subr.bf16.mxu0 0
        %1273 = vmatpush2.bf16.msra.mxu0 0
        %1274 = vmatprep.subr.bf16.mxu0 0
        %1275 = vmatpush2.bf16.msra.mxu0 0
        %1276 = vmatprep.subr.bf16.mxu0 0
        %1277 = vmatpush2.bf16.msra.mxu0 0
        %1278 = vmatprep.mubr.bf16.mxu0 0
        %1279 = vmatmul.mubr.bf16.gmra.mxu0 %v1244
        %v1280 = vpop.f32.mrf.mxu0
        %v1281 = vadd.f32 0.0, %v1280
        %v1282 = vpop.f32.mrf.mxu0
        %v1283 = vpop.f32.mrf.mxu0
        %v1284 = vadd.f32 0.0, %v1283
        %v1285 = vpop.f32.mrf.mxu0
        %1286 = vdwg.mxu0
        %1289 = vrot.lane.b32.xlu0 %v1281, 16
        %v1290 = vpop.permute.xlu0 %1289
        %1291 = vrot.lane.b32.xlu0 %v1284, 16
        %v1292 = vpop.permute.xlu0 %1291
        %v1295 = vsel %vm1034, %v1156, %v1290
        %v1296 = vsel %vm1034, %v1159, %v1292
        %v1297 = vpack.c.bf16 %v1296, %v1295
        %v1299 = vlaneseq
        %v1300 = vshrl.u32 %v1299, 7
        %v1301 = vsub.s32 0, %v1300
        %v1302 = vrot.slane %v947, %v1301
        %v1308 = vunpack.c.l.b16 %v943
        %v1309 = vunpack.c.l.b16 %v944
        %v1310 = vunpack.c.l.b16 %v945
        %v1311 = vunpack.c.l.b16 %v946
        %v1312 = vpack.c.b16 %v1309, %v1308
        %v1313 = vpack.c.b16 %v1311, %v1310
        %v1317 = vsel %vm985, %v1297, 0
        %1319 = vmatprep.subr.bf16.mxu0 0
        %1320 = vmatpush1.bf16.msra.mxu0 0
        %1321 = vmatprep.subr.bf16.mxu0 0
        %1322 = vmatpush1.bf16.msra.mxu0 0
        %1323 = vmatprep.subr.bf16.mxu0 0
        %1324 = vmatpush1.bf16.msra.mxu0 0
        %1325 = vmatprep.subr.bf16.mxu0 0
        %1326 = vmatpush1.bf16.msra.mxu0 0
        %1327 = vmatprep.subr.bf16.mxu0 0
        %1328 = vmatpush1.bf16.msra.mxu0 0
        %1329 = vmatprep.subr.bf16.mxu0 0
        %1330 = vmatpush1.bf16.msra.mxu0 0
        %1331 = vmatprep.subr.bf16.mxu0 0
        %1332 = vmatpush1.bf16.msra.mxu0 %v1313
        %1333 = vmatprep.subr.bf16.mxu0 0
        %1334 = vmatpush1.bf16.msra.mxu0 %v1312
        %1335 = vmatprep.subr.bf16.mxu0 0
        %1336 = vmatpush2.bf16.msra.mxu0 0
        %1337 = vmatprep.subr.bf16.mxu0 0
        %1338 = vmatpush2.bf16.msra.mxu0 0
        %1339 = vmatprep.subr.bf16.mxu0 0
        %1340 = vmatpush2.bf16.msra.mxu0 0
        %1341 = vmatprep.subr.bf16.mxu0 0
        %1342 = vmatpush2.bf16.msra.mxu0 0
        %1343 = vmatprep.subr.bf16.mxu0 0
        %1344 = vmatpush2.bf16.msra.mxu0 0
        %1345 = vmatprep.subr.bf16.mxu0 0
        %1346 = vmatpush2.bf16.msra.mxu0 0
        %1347 = vmatprep.subr.bf16.mxu0 0
        %1348 = vmatpush2.bf16.msra.mxu0 0
        %1349 = vmatprep.subr.bf16.mxu0 0
        %1350 = vmatpush2.bf16.msra.mxu0 0
        %1351 = vmatprep.mubr.bf16.mxu0 0
        %1352 = vmatmul.mubr.bf16.gmra.mxu0 %v1317
        %v1353 = vpop.f32.mrf.mxu0
        %v1354 = vadd.f32 %v1302, %v1353
        %v1355 = vpop.f32.mrf.mxu0
        %v1356 = vpop.f32.mrf.mxu0
        %v1357 = vadd.f32 %v1302, %v1356
        %v1358 = vpop.f32.mrf.mxu0
        %1359 = vdwg.mxu0
        %v1360 = vadd.f32 %v935, %v1354
        %v1361 = vadd.f32 %v936, %v1357
        %v1362 = vsel %vm985, %v1360, 0.0
        %1363 = vadd.xlane.f32.xlu0 %v1362
        %v1364 = vpop.xlane.xlu0 %1363
        %v1365 = vsel %vm985, %v1361, 0.0
        %1366 = vadd.xlane.f32.xlu0 %v1365
        %v1367 = vpop.xlane.xlu0 %1366
        %v1368 = vrcp.pop 32.0
        %v1369 = vmul.f32 %v1364, %v1368
        %v1370 = vmul.f32 %v1367, %v1368
        %v1371 = vsub.f32 %v1360, %v1369
        %v1372 = vsub.f32 %v1361, %v1370
        %v1373 = vmul.f32 %v1371, %v1371
        %v1374 = vmul.f32 %v1372, %v1372
        %v1375 = vsel %vm985, %v1373, 0.0
        %1376 = vadd.xlane.f32.xlu0 %v1375
        %v1377 = vpop.xlane.xlu0 %1376
        %v1378 = vsel %vm985, %v1374, 0.0
        %1379 = vadd.xlane.f32.xlu0 %v1378
        %v1380 = vpop.xlane.xlu0 %1379
        %v1381 = vmul.f32 %v1377, %v1368
        %v1382 = vmul.f32 %v1380, %v1368
        %v1383 = vadd.f32 %v1381, 1e-12
        %v1384 = vadd.f32 %v1382, 1e-12
        %v1385 = vrsqrt.pop %v1383
        %v1386 = vrsqrt.pop %v1384
        %v1387 = vmul.f32 %v1371, %v1385
        %v1388 = vmul.f32 %v1372, %v1386
        %v1390 = vlaneseq
        %v1391 = vshrl.u32 %v1390, 7
        %v1392 = vsub.s32 0, %v1391
        %v1393 = vrot.slane %v948, %v1392
        %v1395 = vmul.f32 %v1387, %v1393
        %v1396 = vmul.f32 %v1388, %v1393
        %v1398 = vlaneseq
        %v1399 = vshrl.u32 %v1398, 7
        %v1400 = vsub.s32 0, %v1399
        %v1401 = vrot.slane %v949, %v1400
        %v1403 = vadd.f32 %v1395, %v1401
        %v1404 = vadd.f32 %v1396, %v1401
        %v1405 = vpack.c.bf16 %v1404, %v1403
        %v1407 = vlaneseq
        %v1408 = vshrl.u32 %v1407, 7
        %v1409 = vsub.s32 0, %v1408
        %v1410 = vrot.slane %v954, %v1409
        %v1416 = vunpack.c.l.b16 %v950
        %v1417 = vunpack.c.l.b16 %v951
        %v1418 = vunpack.c.l.b16 %v952
        %v1419 = vunpack.c.l.b16 %v953
        %v1420 = vpack.c.b16 %v1417, %v1416
        %v1421 = vpack.c.b16 %v1419, %v1418
        %v1425 = vsel %vm985, %v1405, 0
        %1427 = vmatprep.subr.bf16.mxu0 0
        %1428 = vmatpush1.bf16.msra.mxu0 0
        %1429 = vmatprep.subr.bf16.mxu0 0
        %1430 = vmatpush1.bf16.msra.mxu0 0
        %1431 = vmatprep.subr.bf16.mxu0 0
        %1432 = vmatpush1.bf16.msra.mxu0 0
        %1433 = vmatprep.subr.bf16.mxu0 0
        %1434 = vmatpush1.bf16.msra.mxu0 0
        %1435 = vmatprep.subr.bf16.mxu0 0
        %1436 = vmatpush1.bf16.msra.mxu0 0
        %1437 = vmatprep.subr.bf16.mxu0 0
        %1438 = vmatpush1.bf16.msra.mxu0 0
        %1439 = vmatprep.subr.bf16.mxu0 0
        %1440 = vmatpush1.bf16.msra.mxu0 %v1421
        %1441 = vmatprep.subr.bf16.mxu0 0
        %1442 = vmatpush1.bf16.msra.mxu0 %v1420
        %1443 = vmatprep.subr.bf16.mxu0 0
        %1444 = vmatpush2.bf16.msra.mxu0 0
        %1445 = vmatprep.subr.bf16.mxu0 0
        %1446 = vmatpush2.bf16.msra.mxu0 0
        %1447 = vmatprep.subr.bf16.mxu0 0
        %1448 = vmatpush2.bf16.msra.mxu0 0
        %1449 = vmatprep.subr.bf16.mxu0 0
        %1450 = vmatpush2.bf16.msra.mxu0 0
        %1451 = vmatprep.subr.bf16.mxu0 0
        %1452 = vmatpush2.bf16.msra.mxu0 0
        %1453 = vmatprep.subr.bf16.mxu0 0
        %1454 = vmatpush2.bf16.msra.mxu0 0
        %1455 = vmatprep.subr.bf16.mxu0 0
        %1456 = vmatpush2.bf16.msra.mxu0 0
        %1457 = vmatprep.subr.bf16.mxu0 0
        %1458 = vmatpush2.bf16.msra.mxu0 0
        %1459 = vmatprep.mubr.bf16.mxu0 0
        %1460 = vmatmul.mubr.bf16.gmra.mxu0 %v1425
        %v1461 = vpop.f32.mrf.mxu0
        %v1462 = vadd.f32 %v1410, %v1461
        %v1463 = vpop.f32.mrf.mxu0
        %v1464 = vpop.f32.mrf.mxu0
        %v1465 = vadd.f32 %v1410, %v1464
        %v1466 = vpop.f32.mrf.mxu0
        %1467 = vdwg.mxu0
        %v1468 = vmul.f32 %v1462, %v1462
        %v1469 = vmul.f32 %v1465, %v1465
        %v1470 = vmul.f32 %v1462, %v1468
        %v1471 = vmul.f32 %v1465, %v1469
        %v1472 = vmul.f32 %v1470, 0.044715
        %v1473 = vmul.f32 %v1471, 0.044715
        %v1474 = vadd.f32 %v1462, %v1472
        %v1475 = vadd.f32 %v1465, %v1473
        %v1476 = vmul.f32 %v1474, 0.7978846
        %v1477 = vmul.f32 %v1475, 0.7978846
        %v1478 = vtanh.pop %v1476
        %v1479 = vtanh.pop %v1477
        %v1480 = vadd.f32 %v1478, 1.0
        %v1481 = vadd.f32 %v1479, 1.0
        %v1482 = vmul.f32 %v1480, 0.5
        %v1483 = vmul.f32 %v1481, 0.5
        %v1484 = vmul.f32 %v1462, %v1482
        %v1485 = vmul.f32 %v1465, %v1483
        %v1486 = vpack.c.bf16 %v1485, %v1484
        %v1488 = vlaneseq
        %v1489 = vshrl.u32 %v1488, 7
        %v1490 = vsub.s32 0, %v1489
        %v1491 = vrot.slane %v963, %v1490
        %v1501 = vunpack.c.l.b16 %v955
        %v1502 = vunpack.c.l.b16 %v956
        %v1503 = vunpack.c.l.b16 %v957
        %v1504 = vunpack.c.l.b16 %v958
        %v1505 = vunpack.c.l.b16 %v959
        %v1506 = vunpack.c.l.b16 %v960
        %v1507 = vunpack.c.l.b16 %v961
        %v1508 = vunpack.c.l.b16 %v962
        %v1509 = vpack.c.b16 %v1502, %v1501
        %v1510 = vpack.c.b16 %v1504, %v1503
        %v1511 = vpack.c.b16 %v1506, %v1505
        %v1512 = vpack.c.b16 %v1508, %v1507
        %vm1517 = vcmask 523264
        %v1519 = vsel %vm1517, %v1486, 0
        %1521 = vmatprep.subr.bf16.mxu0 0
        %1522 = vmatpush1.bf16.msra.mxu0 0
        %1523 = vmatprep.subr.bf16.mxu0 0
        %1524 = vmatpush1.bf16.msra.mxu0 0
        %1525 = vmatprep.subr.bf16.mxu0 0
        %1526 = vmatpush1.bf16.msra.mxu0 0
        %1527 = vmatprep.subr.bf16.mxu0 0
        %1528 = vmatpush1.bf16.msra.mxu0 0
        %1529 = vmatprep.subr.bf16.mxu0 0
        %1530 = vmatpush1.bf16.msra.mxu0 %v1512
        %1531 = vmatprep.subr.bf16.mxu0 0
        %1532 = vmatpush1.bf16.msra.mxu0 %v1511
        %1533 = vmatprep.subr.bf16.mxu0 0
        %1534 = vmatpush1.bf16.msra.mxu0 %v1510
        %1535 = vmatprep.subr.bf16.mxu0 0
        %1536 = vmatpush1.bf16.msra.mxu0 %v1509
        %1537 = vmatprep.subr.bf16.mxu0 0
        %1538 = vmatpush2.bf16.msra.mxu0 0
        %1539 = vmatprep.subr.bf16.mxu0 0
        %1540 = vmatpush2.bf16.msra.mxu0 0
        %1541 = vmatprep.subr.bf16.mxu0 0
        %1542 = vmatpush2.bf16.msra.mxu0 0
        %1543 = vmatprep.subr.bf16.mxu0 0
        %1544 = vmatpush2.bf16.msra.mxu0 0
        %1545 = vmatprep.subr.bf16.mxu0 0
        %1546 = vmatpush2.bf16.msra.mxu0 0
        %1547 = vmatprep.subr.bf16.mxu0 0
        %1548 = vmatpush2.bf16.msra.mxu0 0
        %1549 = vmatprep.subr.bf16.mxu0 0
        %1550 = vmatpush2.bf16.msra.mxu0 0
        %1551 = vmatprep.subr.bf16.mxu0 0
        %1552 = vmatpush2.bf16.msra.mxu0 0
        %1553 = vmatprep.mubr.bf16.mxu0 0
        %1554 = vmatmul.mubr.bf16.gmra.mxu0 %v1519
        %v1555 = vpop.f32.mrf.mxu0
        %v1556 = vadd.f32 %v1491, %v1555
        %v1557 = vpop.f32.mrf.mxu0
        %v1558 = vpop.f32.mrf.mxu0
        %v1559 = vadd.f32 %v1491, %v1558
        %v1560 = vpop.f32.mrf.mxu0
        %1561 = vdwg.mxu0
        %v1562 = vadd.f32 %v1403, %v1556
        %v1563 = vadd.f32 %v1404, %v1559
        %v1564 = vsel %vm985, %v1562, 0.0
        %1565 = vadd.xlane.f32.xlu0 %v1564
        %v1566 = vpop.xlane.xlu0 %1565
        %v1567 = vsel %vm985, %v1563, 0.0
        %1568 = vadd.xlane.f32.xlu0 %v1567
        %v1569 = vpop.xlane.xlu0 %1568
        %v1570 = vmul.f32 %v1566, %v1368
        %v1571 = vmul.f32 %v1569, %v1368
        %v1572 = vsub.f32 %v1562, %v1570
        %v1573 = vsub.f32 %v1563, %v1571
        %v1574 = vmul.f32 %v1572, %v1572
        %v1575 = vmul.f32 %v1573, %v1573
        %v1576 = vsel %vm985, %v1574, 0.0
        %1577 = vadd.xlane.f32.xlu0 %v1576
        %v1578 = vpop.xlane.xlu0 %1577
        %v1579 = vsel %vm985, %v1575, 0.0
        %1580 = vadd.xlane.f32.xlu0 %v1579
        %v1581 = vpop.xlane.xlu0 %1580
        %v1582 = vmul.f32 %v1578, %v1368
        %v1583 = vmul.f32 %v1581, %v1368
        %v1584 = vadd.f32 %v1582, 1e-12
        %v1585 = vadd.f32 %v1583, 1e-12
        %v1586 = vrsqrt.pop %v1584
        %v1587 = vrsqrt.pop %v1585
        %v1588 = vmul.f32 %v1572, %v1586
        %v1589 = vmul.f32 %v1573, %v1587
        %v1591 = vlaneseq
        %v1592 = vshrl.u32 %v1591, 7
        %v1593 = vsub.s32 0, %v1592
        %v1594 = vrot.slane %v964, %v1593
        %v1596 = vmul.f32 %v1588, %v1594
        %v1597 = vmul.f32 %v1589, %v1594
        %v1599 = vlaneseq
        %v1600 = vshrl.u32 %v1599, 7
        %v1601 = vsub.s32 0, %v1600
        %v1602 = vrot.slane %v965, %v1601
        %v1604 = vadd.f32 %v1596, %v1602
        %v1605 = vadd.f32 %v1597, %v1602
        %1606 = vst.msk [vmem:[#allocation2] sm:$0xff] %vm985, %v1604
        %1607 = vst.msk [vmem:[#allocation2 + $0x8] sm:$0xff] %vm985, %v1605
        %p1608 = scmp.eq.s32.totalorder %s52, 1
        // Predicated region
        $region109: #{tpu_custom_call.1} parent=91 // pred_check
          %p1609 = pneg %p1608
        $region110: #{tpu_custom_call.1} parent=91 // pred_check_branch
          %1611 = sbr.rel (%p1609) target = $region112
        $region111: #{tpu_custom_call.1} parent=91 // pred_region
          %v1612 = vld [vmem:[%s18] sm:$0x1]
          %v1613 = vpack.c.bf16 %v1605, %v1604
          %v1614 = vld [vmem:[%s19] sm:$0x3]
          %1616 = vset.pattern.permute.xlu0 0
          %1617 = vperm.xlu0 %1616, %v1614
          %v1618 = vpop.permute.xlu0 %1617
          %v1621 = vsel %vm985, %v1612, 0
          %v1624 = vsel %vm985, %v1613, 0
          %1626 = vmatprep.subr.bf16.mxu0 0
          %1627 = vmatpush1.bf16.xpose.msra.mxu0 0
          %1628 = vmatprep.subr.bf16.mxu0 0
          %1629 = vmatpush1.bf16.xpose.msra.mxu0 0
          %1630 = vmatprep.subr.bf16.mxu0 0
          %1631 = vmatpush1.bf16.xpose.msra.mxu0 0
          %1632 = vmatprep.subr.bf16.mxu0 0
          %1633 = vmatpush1.bf16.xpose.msra.mxu0 0
          %1634 = vmatprep.subr.bf16.mxu0 0
          %1635 = vmatpush1.bf16.xpose.msra.mxu0 0
          %1636 = vmatprep.subr.bf16.mxu0 0
          %1637 = vmatpush1.bf16.xpose.msra.mxu0 0
          %1638 = vmatprep.subr.bf16.mxu0 0
          %1639 = vmatpush1.bf16.xpose.msra.mxu0 0
          %1640 = vmatprep.subr.bf16.mxu0 0
          %1641 = vmatpush1.bf16.xpose.msra.mxu0 %v1624
          %1642 = vmatprep.subr.bf16.mxu0 0
          %1643 = vmatpush2.bf16.xpose.msra.mxu0 0
          %1644 = vmatprep.subr.bf16.mxu0 0
          %1645 = vmatpush2.bf16.xpose.msra.mxu0 0
          %1646 = vmatprep.subr.bf16.mxu0 0
          %1647 = vmatpush2.bf16.xpose.msra.mxu0 0
          %1648 = vmatprep.subr.bf16.mxu0 0
          %1649 = vmatpush2.bf16.xpose.msra.mxu0 0
          %1650 = vmatprep.subr.bf16.mxu0 0
          %1651 = vmatpush2.bf16.xpose.msra.mxu0 0
          %1652 = vmatprep.subr.bf16.mxu0 0
          %1653 = vmatpush2.bf16.xpose.msra.mxu0 0
          %1654 = vmatprep.subr.bf16.mxu0 0
          %1655 = vmatpush2.bf16.xpose.msra.mxu0 0
          %1656 = vmatprep.subr.bf16.mxu0 0
          %1657 = vmatpush2.bf16.xpose.msra.mxu0 0
          %1658 = vmatprep.mubr.bf16.mxu0 0
          %1659 = vmatmul.mubr.bf16.gmra.mxu0 %v1621
          %v1660 = vpop.f32.mrf.mxu0
          %v1661 = vadd.f32 %v1618, %v1660
          %v1662 = vpop.f32.mrf.mxu0
          %v1663 = vpop.f32.mrf.mxu0
          %v1664 = vpop.f32.mrf.mxu0
          %1665 = vdwg.mxu0
          %v1666 = vsel %vm1034, %v1661, 0.0
          %1667 = vst [vmem:[%s826] sm:$0x3] %v1666
          %v1668 = vlaneseq
          %v1669 = vand.u32 %v1668, 127
          %s1670 = sld [smem:[#allocation4 + %s51]]
          %p1671 = scmp.gt.s32.totalorder %s1670, 0
          %s1672 = scalar_select %p1671, %s1670, 0
          %p1673 = scmp.lt.s32.totalorder %s1672, 16
          %s1674 = scalar_select %p1673, %s1672, 16
          %vm1675 = vcmask 122880
          %v1676 = vsel %vm1675, %v1661, -inf
          %1677 = vmax.xlane.f32.xlu0 %v1676
          %v1678 = vpop.xlane.xlu0 %1677
          %v1679 = vrot.slane %v1678, 4
          %v1680 = vmax.f32 %v1678, %v1679
          %v1681 = vrot.slane %v1680, 2
          %v1682 = vmax.f32 %v1680, %v1681
          %v1683 = vrot.slane %v1682, 1
          %v1684 = vmax.f32 %v1682, %v1683
          %s1685 = vtos %v1684
          %v1686 = vstv %s1685
          %v1687 = vsub.f32 %v1661, %v1686
          %v1688 = vmul.f32 %v1687, 1.442695
          %v1689 = vpow.pop %v1688
          %v1690 = vsel %vm1675, %v1689, 0.0
          %1691 = vadd.xlane.f32.xlu0 %v1690
          %v1692 = vpop.xlane.xlu0 %1691
          %v1693 = vrot.slane %v1692, 4
          %v1694 = vadd.f32 %v1692, %v1693
          %v1695 = vrot.slane %v1694, 2
          %v1696 = vadd.f32 %v1694, %v1695
          %v1697 = vrot.slane %v1696, 1
          %v1698 = vadd.f32 %v1696, %v1697
          %s1699 = vtos %v1698
          %v1700 = vstv %s1699
          %v1701 = vlog2.pop %v1700
          %v1702 = vmul.f32 %v1701, 0.6931472
          %s1703 = vtos %v1702
          %s1704 = sadd.f32 %s1703, %s1685
          %v1705 = vstv %s1674
          %vm1706 = vcmp.eq.s32.totalorder %v1669, %v1705
          %v1707 = vsel %vm1706, %v1661, 0.0
          %v1708 = vsel %vm1675, %v1707, 0.0
          %1709 = vadd.xlane.f32.xlu0 %v1708
          %v1710 = vpop.xlane.xlu0 %1709
          %v1711 = vrot.slane %v1710, 4
          %v1712 = vadd.f32 %v1710, %v1711
          %v1713 = vrot.slane %v1712, 2
          %v1714 = vadd.f32 %v1712, %v1713
          %v1715 = vrot.slane %v1714, 1
          %v1716 = vadd.f32 %v1714, %v1715
          %s1717 = vtos %v1716
          %p1718 = scmp.ne.s32.totalorder %s1674, 16
          %s1719 = scalar_select %p1718, 1, 0
          %s1720 = scvt.s32.f32 %s1719
          %s1721 = ssub.f32 %s1704, %s1717
          %s1722 = smul.f32 %s1721, %s1720
          %s1723 = sld [smem:[#allocation5 + %s51]]
          %p1724 = scmp.gt.s32.totalorder %s1723, 0
          %s1725 = scalar_select %p1724, %s1723, 0
          %p1726 = scmp.lt.s32.totalorder %s1725, 16
          %s1727 = scalar_select %p1726, %s1725, 16
          %vm1728 = vcmask 123905
          %v1729 = vsel %vm1728, %v1661, -inf
          %1730 = vmax.xlane.f32.xlu0 %v1729
          %v1731 = vpop.xlane.xlu0 %1730
          %v1732 = vrot.slane %v1731, 4
          %v1733 = vmax.f32 %v1731, %v1732
          %v1734 = vrot.slane %v1733, 2
          %v1735 = vmax.f32 %v1733, %v1734
          %v1736 = vrot.slane %v1735, 1
          %v1737 = vmax.f32 %v1735, %v1736
          %s1738 = vtos %v1737
          %v1739 = vstv %s1738
          %v1740 = vsub.f32 %v1661, %v1739
          %v1741 = vmul.f32 %v1740, 1.442695
          %v1742 = vpow.pop %v1741
          %v1744 = vrot.slane %v1742, 1
          %v1746 = vsel %vm1675, %v1744, 0.0
          %1747 = vadd.xlane.f32.xlu0 %v1746
          %v1748 = vpop.xlane.xlu0 %1747
          %v1749 = vrot.slane %v1748, 4
          %v1750 = vadd.f32 %v1748, %v1749
          %v1751 = vrot.slane %v1750, 2
          %v1752 = vadd.f32 %v1750, %v1751
          %v1753 = vrot.slane %v1752, 1
          %v1754 = vadd.f32 %v1752, %v1753
          %s1755 = vtos %v1754
          %v1756 = vstv %s1755
          %v1757 = vlog2.pop %v1756
          %v1758 = vmul.f32 %v1757, 0.6931472
          %s1759 = vtos %v1758
          %s1760 = sadd.f32 %s1759, %s1738
          %v1761 = vstv %s1727
          %vm1762 = vcmp.eq.s32.totalorder %v1669, %v1761
          %v1763 = vsel %vm1762, %v1661, 0.0
          %v1765 = vrot.slane %v1763, 1
          %v1767 = vsel %vm1675, %v1765, 0.0
          %1768 = vadd.xlane.f32.xlu0 %v1767
          %v1769 = vpop.xlane.xlu0 %1768
          %v1770 = vrot.slane %v1769, 4
          %v1771 = vadd.f32 %v1769, %v1770
          %v1772 = vrot.slane %v1771, 2
          %v1773 = vadd.f32 %v1771, %v1772
          %v1774 = vrot.slane %v1773, 1
          %v1775 = vadd.f32 %v1773, %v1774
          %s1776 = vtos %v1775
          %p1777 = scmp.ne.s32.totalorder %s1727, 16
          %s1778 = scalar_select %p1777, 1, 0
          %s1779 = scvt.s32.f32 %s1778
          %s1780 = ssub.f32 %s1760, %s1776
          %s1781 = smul.f32 %s1780, %s1779
          %vm1782 = vcmp.eq.s32.totalorder %v1669, 0
          %v1783 = vstv %s1722
          %v1784 = vsel %vm1782, %v1783, 0.0
          %vm1785 = vcmp.eq.s32.totalorder %v1669, 1
          %v1786 = vstv %s1720
          %v1787 = vsel %vm1785, %v1786, 0.0
          %v1788 = vadd.f32 %v1784, %v1787
          %vm1789 = vcmp.eq.s32.totalorder %v1669, 2
          %v1790 = vstv %s1781
          %v1791 = vsel %vm1789, %v1790, 0.0
          %v1792 = vadd.f32 %v1788, %v1791
          %vm1793 = vcmp.eq.s32.totalorder %v1669, 3
          %v1794 = vstv %s1779
          %v1795 = vsel %vm1793, %v1794, 0.0
          %v1796 = vadd.f32 %v1792, %v1795
          %1797 = vst [vmem:[%s832] sm:$0x1] %v1796
        $region112: #{tpu_custom_call.1} parent=91 // pred_fallthru
          _
        %s1798 = sand.u32 %s515, 1
        %s1799 = scalar_lea.sflag [#allocation8], %s1798
        %s1800 = sand.u32 %s515, 1
        %s1801 = smul.addr %s1800, 2
        %s1802 = scalar_lea.vmem [#allocation12], %s1801
        %s1803 = sand.u32 %s541, 1
        %s1804 = scalar_lea.sflag [#allocation14], %s1803
        %s1805 = sand.u32 %s541, 1
        %s1806 = scalar_lea.vmem [#allocation13], %s1805
        // Predicated region
        $region113: #{tpu_custom_call.1} parent=91 // pred_check
          %p1807 = pneg %p525
        $region114: #{tpu_custom_call.1} parent=91 // pred_check_branch
          %1809 = sbr.rel (%p1807) target = $region116
        $region115: #{tpu_custom_call.1} parent=91 // pred_region
          %s1811 = ssub.s32 32, 32
          %1812 = vsyncadd %s1799, %s1811
          %s1813 = smul.addr %s51, 32
          %s1814 = scalar_lea.hbm %s20, %s1813
          %s1816 = sshll.u32 %s1802, 4
          %s1817 = int_to_ptr.vmem [resolvable:$true] %s1816
          %1819 = dma.vmem_to_hbm [thread:$0]  %s1817, 32, %s1814, %s1799
        $region116: #{tpu_custom_call.1} parent=91 // pred_fallthru
          _
        // Predicated region
        $region117: #{tpu_custom_call.1} parent=91 // pred_check
          %p1820 = pneg %p551
        $region118: #{tpu_custom_call.1} parent=91 // pred_check_branch
          %1822 = sbr.rel (%p1820) target = $region120
        $region119: #{tpu_custom_call.1} parent=91 // pred_region
          %s1824 = ssub.s32 16, 16
          %1825 = vsyncadd %s1804, %s1824
          %s1826 = smul.addr %s51, 16
          %s1827 = scalar_lea.hbm %s21, %s1826
          %s1829 = sshll.u32 %s1806, 4
          %s1830 = int_to_ptr.vmem [resolvable:$true] %s1829
          %1832 = dma.vmem_to_hbm [thread:$0]  %s1830, 16, %s1827, %s1804
        $region120: #{tpu_custom_call.1} parent=91 // pred_fallthru
          _
      $region92: #{tpu_custom_call.1} parent=5 // pred_fallthru
        _
      %p1833 = scmp.le.s32.totalorder 2, %s42
      // Predicated region
      $region121: #{tpu_custom_call.1} parent=5 // pred_check
        %p1834 = pneg %p1833
      $region122: #{tpu_custom_call.1} parent=5 // pred_check_branch
        %1836 = sbr.rel (%p1834) target = $region124
      $region123: #{tpu_custom_call.1} parent=5 // pred_region
        %s1837 = ssub.s32 %s42, 2
        // Predicated region
        $region125: #{tpu_custom_call.1} parent=123 // pred_check
          %p1838 = pneg %p531
        $region126: #{tpu_custom_call.1} parent=123 // pred_check_branch
          %1840 = sbr.rel (%p1838) target = $region128
        $region127: #{tpu_custom_call.1} parent=123 // pred_region
          %s1841 = sand.u32 %s516, 1
          %s1842 = scalar_lea.sflag [#allocation8], %s1841
          %s1843 = sand.u32 %s516, 1
          %s1844 = smul.addr %s1843, 2
          %s1845 = scalar_lea.vmem [#allocation12], %s1844
          %1846 = dma.done %s1842, 32
        $region128: #{tpu_custom_call.1} parent=123 // pred_fallthru
          _
        // Predicated region
        $region129: #{tpu_custom_call.1} parent=123 // pred_check
          %p1847 = pneg %p557
        $region130: #{tpu_custom_call.1} parent=123 // pred_check_branch
          %1849 = sbr.rel (%p1847) target = $region132
        $region131: #{tpu_custom_call.1} parent=123 // pred_region
          %s1850 = sand.u32 %s542, 1
          %s1851 = scalar_lea.sflag [#allocation14], %s1850
          %s1852 = sand.u32 %s542, 1
          %s1853 = scalar_lea.vmem [#allocation13], %s1852
          %1854 = dma.done %s1851, 16
        $region132: #{tpu_custom_call.1} parent=123 // pred_fallthru
          _
      $region124: #{tpu_custom_call.1} parent=5 // pred_fallthru
        _
    $region6: #{tpu_custom_call.1} parent=1 // loop_footer
      %s46 = sadd.s32 1, %s42
    $region7: #{tpu_custom_call.1} parent=1 // loop_footer_branch
      %41 = sbr.rel target = $region3
    $region8: #{tpu_custom_call.1} parent=1 // loop_exit
      _
    %1855 = vsyncpa [#allocation7], 1
    %s1856 = scalar_lea.sflag [#allocation7], 1
    %1857 = vsyncpa %s1856, 1
    %1858 = vsyncpa [#allocation10], 1
    %1859 = vsyncpa [#allocation8], 1
    %s1860 = scalar_lea.sflag [#allocation8], 1
    %1861 = vsyncpa %s1860, 1
    %1862 = vsyncpa [#allocation14], 1
    %s1863 = scalar_lea.sflag [#allocation14], 1
    %1864 = vsyncpa %s1863, 1

</llo_original>
